<compile_context>
chip_gen: v7x
topology: tpu7x:2x2x1
jax: 0.10.0
libtpu: 0.0.40
codegen_flags: <defaults>
</compile_context>

<pallas_src>
import jax
import jax.numpy as jnp
from jax import lax
from jax.experimental import pallas as pl
from jax.experimental.pallas import tpu as pltpu

COORDS_WEIGHT = 1.0  # default coords_weight in the module


def _e_gcl_vel_kernel(
    row_ref, col_ref,                      # [TE,1] int32 edge-index tiles
    h_ref, coord_ref, vel_ref, cnt_ref,    # node tensors (full, resident)
    we1a_ref, we1b_ref, we1c_ref, be1_ref, we2_ref, be2_ref,   # edge_mlp
    wc1_ref, bc1_ref, wc2t_ref,                                # coord_mlp
    wv1_ref, bv1_ref, wv2t_ref, bv2_ref,                       # coord_mlp_vel
    wn1a_ref, wn1b_ref, bn1_ref, wn2_ref, bn2_ref,             # node_mlp
    h_out_ref, coord_out_ref,                                  # outputs
    agg_feat_ref, agg_trans_ref,                               # VMEM scratch
):
    et = pl.program_id(0)
    n_et = pl.num_programs(0)

    @pl.when(et == 0)
    def _init():
        agg_feat_ref[...] = jnp.zeros_like(agg_feat_ref)
        agg_trans_ref[...] = jnp.zeros_like(agg_trans_ref)

    row = row_ref[...]          # [TE, 1]
    col = col_ref[...]          # [TE, 1]
    h = h_ref[...]              # [N, F]  f32
    coord = coord_ref[...]      # [N, 3]  f32

    te = row.shape[0]
    n = h.shape[0]

    # One-hot gather/scatter matrices (padded edges -> index out of range -> 0)
    node_ids = lax.broadcasted_iota(jnp.int32, (te, n), 1)
    row_oh = (row == node_ids).astype(jnp.float32)
    col_oh = (col == node_ids).astype(jnp.float32)

    # ---- coord2radial (one-hot gather on MXU, f32) -------------------------
    coord_row = jnp.dot(row_oh, coord, preferred_element_type=jnp.float32)
    coord_col = jnp.dot(col_oh, coord, preferred_element_type=jnp.float32)
    coord_diff = coord_row - coord_col                                 # [TE, 3]
    radial = jnp.sum(coord_diff * coord_diff, axis=1, keepdims=True)   # [TE, 1]
    # norm_diff = False (default): no normalization of coord_diff

    h_row = jnp.dot(row_oh, h, preferred_element_type=jnp.float32)     # [TE, F]
    h_col = jnp.dot(col_oh, h, preferred_element_type=jnp.float32)     # [TE, F]

    bf16 = jnp.bfloat16
    # ---- edge_model (edge_attr None, attention False); split-weight layer 1 -
    e_pre = (
        jnp.dot(h_row.astype(bf16), we1a_ref[...],
                preferred_element_type=jnp.float32)
        + jnp.dot(h_col.astype(bf16), we1b_ref[...],
                  preferred_element_type=jnp.float32)
        + radial * we1c_ref[...]          # broadcast multiply, no concat
        + be1_ref[...])
    e1 = jnp.maximum(e_pre, 0.0)
    edge_feat = jnp.maximum(
        jnp.dot(e1.astype(bf16), we2_ref[...],
                preferred_element_type=jnp.float32)
        + be2_ref[...], 0.0)                                           # [TE, H]

    # ---- coord_model: hidden layer on MXU, 1-wide head on VPU + lane reduce -
    c1 = jnp.maximum(
        jnp.dot(edge_feat.astype(bf16), wc1_ref[...],
                preferred_element_type=jnp.float32)
        + bc1_ref[...], 0.0)
    cw = jnp.sum(c1 * wc2t_ref[...], axis=1, keepdims=True)            # [TE, 1]
    trans = jnp.clip(coord_diff * cw, -100.0, 100.0)                   # [TE, 3]

    # ---- segment reductions: contract the edge axis, shared one-hot LHS -----
    dn = (((0,), (0,)), ((), ()))
    agg_feat_ref[...] += lax.dot_general(
        row_oh, edge_feat, dimension_numbers=dn,
        preferred_element_type=jnp.float32)                            # [N, H]
    agg_trans_ref[...] += lax.dot_general(
        row_oh, trans, dimension_numbers=dn,
        preferred_element_type=jnp.float32)                            # [N, 3]

    @pl.when(et == n_et - 1)
    def _finalize():
        vel = vel_ref[...]
        # unsorted_segment_mean: counts precomputed outside; EUP reciprocal
        inv_cnt = pl.reciprocal(jnp.maximum(cnt_ref[...], 1.0), approx=True)
        coord_new = coord + agg_trans_ref[...] * inv_cnt * COORDS_WEIGHT

        hb = h.astype(bf16)
        # coord_mlp_vel: hidden layer on MXU, 1-wide head on VPU + lane reduce
        v1 = jnp.maximum(
            jnp.dot(hb, wv1_ref[...], preferred_element_type=jnp.float32)
            + bv1_ref[...], 0.0)
        vw = jnp.sum(v1 * wv2t_ref[...], axis=1, keepdims=True) + bv2_ref[...]
        coord_out_ref[...] = coord_new + vw * vel

        # node_model (node_attr None, recurrent True); split-weight layer 1
        n1 = jnp.maximum(
            jnp.dot(hb, wn1a_ref[...], preferred_element_type=jnp.float32)
            + jnp.dot(agg_feat_ref[...].astype(bf16), wn1b_ref[...],
                      preferred_element_type=jnp.float32)
            + bn1_ref[...], 0.0)
        h_out_ref[...] = (
            h
            + jnp.dot(n1.astype(bf16), wn2_ref[...],
                      preferred_element_type=jnp.float32)
            + bn2_ref[...])


def e_gcl_vel_forward(h, row, col, coord, vel, params, *, te=256):
    h = h.astype(jnp.float32)
    coord = coord.astype(jnp.float32)
    vel = vel.astype(jnp.float32)
    N, F = h.shape
    H = params["we2"].shape[0]
    F_out = params["wn2"].shape[1]
    E = row.shape[0]

    # edge tile size: multiple of 8, no larger than the padded edge count
    te = max(8, min(te, ((E + 7) // 8) * 8))
    te = (te // 8) * 8
    n_tiles = -(-E // te)
    E_pad = n_tiles * te

    # pad edge lists with an out-of-range index -> all-zero one-hot rows
    row_p = jnp.full((E_pad, 1), N, jnp.int32).at[:E, 0].set(row.astype(jnp.int32))
    col_p = jnp.full((E_pad, 1), N, jnp.int32).at[:E, 0].set(col.astype(jnp.int32))

    # per-node in-degree (segment counts), precomputed outside the kernel
    counts = jnp.zeros((N, 1), jnp.float32).at[row, 0].add(1.0)

    bf16 = jnp.bfloat16
    f32 = jnp.float32
    we1 = params["we1"].astype(f32)   # [2F+1, H]
    wn1 = params["wn1"].astype(f32)   # [F+H, H]
    weights = (
        we1[:F].astype(bf16), we1[F:2 * F].astype(bf16), we1[2 * F:].astype(f32),
        params["be1"].astype(f32),
        params["we2"].astype(bf16), params["be2"].astype(f32),
        params["wc1"].astype(bf16), params["bc1"].astype(f32),
        params["wc2"].astype(f32).T,                     # [1, H]
        params["wv1"].astype(bf16), params["bv1"].astype(f32),
        params["wv2"].astype(f32).T,                     # [1, H]
        params["bv2"].astype(f32),
        wn1[:F].astype(bf16), wn1[F:].astype(bf16), params["bn1"].astype(f32),
        params["wn2"].astype(bf16), params["bn2"].astype(f32),
    )
    args = (row_p, col_p, h, coord, vel, counts) + weights

    def full_spec(a):                      # all non-edge tensors are 2-D
        return pl.BlockSpec(a.shape, lambda et: (0, 0))

    edge_spec = pl.BlockSpec((te, 1), lambda et: (et, 0))
    in_specs = [edge_spec, edge_spec] + [full_spec(a) for a in args[2:]]
    out_specs = (pl.BlockSpec((N, F_out), lambda et: (0, 0)),
                 pl.BlockSpec((N, 3), lambda et: (0, 0)))

    # ---- advisory VMEM / cost numbers --------------------------------------
    wbytes = sum(int(w.size * w.dtype.itemsize) for w in weights)
    per_tile = 4 * (2 * te * N + te * (2 * F + 8) + 4 * te * H)
    resident = 4 * (3 * N * F + 5 * N * 3 + N + 3 * N * H)
    vmem_bytes = int(min(2 * (per_tile + resident + wbytes) + (8 << 20), 60 << 20))

    flops = int(
        2 * E_pad * N * (2 * F + 6 + H + 3)              # one-hot gathers+scatters
        + 2 * E_pad * (2 * F * H + 2 * H * H + 2 * H)    # edge/coord MLPs + cw head
        + 2 * N * (F * H + H)                            # coord_mlp_vel
        + 2 * N * ((F + H) * H + H * F_out))             # node MLP
    bytes_accessed = int(
        4 * (h.size + coord.size + vel.size + counts.size + N * F_out + N * 3)
        + 8 * E_pad + wbytes)

    return pl.pallas_call(
        _e_gcl_vel_kernel,
        out_shape=(jax.ShapeDtypeStruct((N, F_out), jnp.float32),
                   jax.ShapeDtypeStruct((N, 3), jnp.float32)),
        grid_spec=pltpu.PrefetchScalarGridSpec(
            num_scalar_prefetch=0,
            grid=(n_tiles,),
            in_specs=in_specs,
            out_specs=out_specs,
            scratch_shapes=[pltpu.VMEM((N, H), jnp.float32),
                            pltpu.VMEM((N, 3), jnp.float32)]),
        compiler_params=pltpu.CompilerParams(
            dimension_semantics=("arbitrary",),
            vmem_limit_bytes=vmem_bytes),
        cost_estimate=pl.CostEstimate(
            flops=flops, transcendentals=int(N), bytes_accessed=bytes_accessed),
    )(*args)


def _ref_forward(h, row, col, coord, vel, p):
    """Pure-JAX f32 reference mirroring the PyTorch module semantics."""
    N = h.shape[0]
    relu = jax.nn.relu
    coord_diff = coord[row] - coord[col]
    radial = jnp.sum(coord_diff ** 2, axis=1, keepdims=True)
    edge_in = jnp.concatenate([h[row], h[col], radial], axis=1)
    e1 = relu(edge_in @ p["we1"] + p["be1"])
    edge_feat = relu(e1 @ p["we2"] + p["be2"])
    c1 = relu(edge_feat @ p["wc1"] + p["bc1"])
    trans = jnp.clip(coord_diff * (c1 @ p["wc2"]), -100.0, 100.0)
    agg_sum = jnp.zeros((N, 3), jnp.float32).at[row].add(trans)
    count = jnp.zeros((N, 1), jnp.float32).at[row].add(
        jnp.ones((row.shape[0], 1), jnp.float32))
    coord_new = coord + (agg_sum / jnp.maximum(count, 1.0)) * COORDS_WEIGHT
    v1 = relu(h @ p["wv1"] + p["bv1"])
    coord_new = coord_new + (v1 @ p["wv2"] + p["bv2"]) * vel
    agg = jnp.zeros((N, edge_feat.shape[1]), jnp.float32).at[row].add(edge_feat)
    node_in = jnp.concatenate([h, agg], axis=1)
    n1 = relu(node_in @ p["wn1"] + p["bn1"])
    h_out = h + (n1 @ p["wn2"] + p["bn2"])
    return h_out, coord_new


def _init_params(key, input_nf, output_nf, hidden_nf):
    """Deterministic synthetic parameter init (shapes match the nn.Module)."""
    ks = jax.random.split(key, 16)
    f32 = jnp.float32
    u = lambda k, shape, s=0.1: jax.random.uniform(k, shape, f32, -s, s)
    in_edge = 2 * input_nf + 1  # input_edge + edge_coords_nf (edges_in_d = 0)
    return {
        # edge_mlp
        "we1": u(ks[0], (in_edge, hidden_nf)), "be1": u(ks[1], (1, hidden_nf)),
        "we2": u(ks[2], (hidden_nf, hidden_nf)), "be2": u(ks[3], (1, hidden_nf)),
        # coord_mlp (final layer: xavier_uniform gain=0.001, no bias)
        "wc1": u(ks[4], (hidden_nf, hidden_nf)), "bc1": u(ks[5], (1, hidden_nf)),
        "wc2": u(ks[6], (hidden_nf, 1), 0.001),
        # coord_mlp_vel
        "wv1": u(ks[7], (input_nf, hidden_nf)), "bv1": u(ks[8], (1, hidden_nf)),
        "wv2": u(ks[9], (hidden_nf, 1)), "bv2": u(ks[10], (1, 1)),
        # node_mlp
        "wn1": u(ks[11], (input_nf + hidden_nf, hidden_nf)),
        "bn1": u(ks[12], (1, hidden_nf)),
        "wn2": u(ks[13], (hidden_nf, output_nf)), "bn2": u(ks[14], (1, output_nf)),
    }


if __name__ == "__main__":
    key = jax.random.PRNGKey(0)
    N, E = 8, 14                 # E not a multiple of the tile -> exercises padding
    input_nf = output_nf = hidden_nf = 32  # recurrent residual: input_nf == output_nf

    k_h, k_c, k_v, k_r, k_cl, k_p = jax.random.split(key, 6)
    h = jax.random.normal(k_h, (N, input_nf), jnp.float32)
    coord = jax.random.normal(k_c, (N, 3), jnp.float32)
    vel = jax.random.normal(k_v, (N, 3), jnp.float32)
    row = jax.random.randint(k_r, (E,), 0, N, jnp.int32)
    col = jax.random.randint(k_cl, (E,), 0, N, jnp.int32)
    params = _init_params(k_p, input_nf, output_nf, hidden_nf)

    # te=8 -> 2 edge tiles, so the init / accumulate / finalize path is exercised.
    h_out, coord_out = jax.block_until_ready(
        e_gcl_vel_forward(h, row, col, coord, vel, params, te=8))

    h_ref, coord_ref = _ref_forward(h, row, col, coord, vel, params)
    # bf16 MXU operands (f32 accumulation) -> tolerance loosened vs pure-f32 ref.
    assert jnp.allclose(h_out, h_ref, atol=5e-2, rtol=5e-2), \
        float(jnp.max(jnp.abs(h_out - h_ref)))
    assert jnp.allclose(coord_out, coord_ref, atol=5e-2, rtol=5e-2), \
        float(jnp.max(jnp.abs(coord_out - coord_ref)))

    print("KERNEL_OK")
</pallas_src>

<mosaic_0001>
module attributes {stable_mosaic.version = 11 : i64} {
  func.func @_e_gcl_vel_kernel(%arg0: i32, %arg1: memref<8x1xi32, #tpu.memory_space<vmem>>, %arg2: memref<8x1xi32, #tpu.memory_space<vmem>>, %arg3: memref<8x32xf32, #tpu.memory_space<vmem>>, %arg4: memref<8x3xf32, #tpu.memory_space<vmem>>, %arg5: memref<8x3xf32, #tpu.memory_space<vmem>>, %arg6: memref<8x1xf32, #tpu.memory_space<vmem>>, %arg7: memref<32x32xbf16, #tpu.memory_space<vmem>>, %arg8: memref<32x32xbf16, #tpu.memory_space<vmem>>, %arg9: memref<1x32xf32, #tpu.memory_space<vmem>>, %arg10: memref<1x32xf32, #tpu.memory_space<vmem>>, %arg11: memref<32x32xbf16, #tpu.memory_space<vmem>>, %arg12: memref<1x32xf32, #tpu.memory_space<vmem>>, %arg13: memref<32x32xbf16, #tpu.memory_space<vmem>>, %arg14: memref<1x32xf32, #tpu.memory_space<vmem>>, %arg15: memref<1x32xf32, #tpu.memory_space<vmem>>, %arg16: memref<32x32xbf16, #tpu.memory_space<vmem>>, %arg17: memref<1x32xf32, #tpu.memory_space<vmem>>, %arg18: memref<1x32xf32, #tpu.memory_space<vmem>>, %arg19: memref<1x1xf32, #tpu.memory_space<vmem>>, %arg20: memref<32x32xbf16, #tpu.memory_space<vmem>>, %arg21: memref<32x32xbf16, #tpu.memory_space<vmem>>, %arg22: memref<1x32xf32, #tpu.memory_space<vmem>>, %arg23: memref<32x32xbf16, #tpu.memory_space<vmem>>, %arg24: memref<1x32xf32, #tpu.memory_space<vmem>>, %arg25: memref<8x32xf32, #tpu.memory_space<vmem>>, %arg26: memref<8x3xf32, #tpu.memory_space<vmem>>, %arg27: memref<8x32xf32, #tpu.memory_space<vmem>>, %arg28: memref<8x3xf32, #tpu.memory_space<vmem>>) attributes {dimension_semantics = [#tpu.dimension_semantics<arbitrary>], iteration_bounds = array<i64: 2>, scalar_prefetch = 0 : i64, scratch_operands = 2 : i64, tpu.core_type = #tpu.core_type<tc>, window_params = [{transform_indices = @transform_0, window_bounds = array<i64: 8, 1>}, {transform_indices = @transform_1, window_bounds = array<i64: 8, 1>}, {pipeline_mode = #tpu.pipeline_mode<synchronous>, transform_indices = @transform_2, window_bounds = array<i64: 8, 32>}, {pipeline_mode = #tpu.pipeline_mode<synchronous>, transform_indices = @transform_3, window_bounds = array<i64: 8, 3>}, {pipeline_mode = #tpu.pipeline_mode<synchronous>, transform_indices = @transform_4, window_bounds = array<i64: 8, 3>}, {pipeline_mode = #tpu.pipeline_mode<synchronous>, transform_indices = @transform_5, window_bounds = array<i64: 8, 1>}, {pipeline_mode = #tpu.pipeline_mode<synchronous>, transform_indices = @transform_6, window_bounds = array<i64: 32, 32>}, {pipeline_mode = #tpu.pipeline_mode<synchronous>, transform_indices = @transform_7, window_bounds = array<i64: 32, 32>}, {pipeline_mode = #tpu.pipeline_mode<synchronous>, transform_indices = @transform_8, window_bounds = array<i64: 1, 32>}, {pipeline_mode = #tpu.pipeline_mode<synchronous>, transform_indices = @transform_9, window_bounds = array<i64: 1, 32>}, {pipeline_mode = #tpu.pipeline_mode<synchronous>, transform_indices = @transform_10, window_bounds = array<i64: 32, 32>}, {pipeline_mode = #tpu.pipeline_mode<synchronous>, transform_indices = @transform_11, window_bounds = array<i64: 1, 32>}, {pipeline_mode = #tpu.pipeline_mode<synchronous>, transform_indices = @transform_12, window_bounds = array<i64: 32, 32>}, {pipeline_mode = #tpu.pipeline_mode<synchronous>, transform_indices = @transform_13, window_bounds = array<i64: 1, 32>}, {pipeline_mode = #tpu.pipeline_mode<synchronous>, transform_indices = @transform_14, window_bounds = array<i64: 1, 32>}, {pipeline_mode = #tpu.pipeline_mode<synchronous>, transform_indices = @transform_15, window_bounds = array<i64: 32, 32>}, {pipeline_mode = #tpu.pipeline_mode<synchronous>, transform_indices = @transform_16, window_bounds = array<i64: 1, 32>}, {pipeline_mode = #tpu.pipeline_mode<synchronous>, transform_indices = @transform_17, window_bounds = array<i64: 1, 32>}, {pipeline_mode = #tpu.pipeline_mode<synchronous>, transform_indices = @transform_18, window_bounds = array<i64: 1, 1>}, {pipeline_mode = #tpu.pipeline_mode<synchronous>, transform_indices = @transform_19, window_bounds = array<i64: 32, 32>}, {pipeline_mode = #tpu.pipeline_mode<synchronous>, transform_indices = @transform_20, window_bounds = array<i64: 32, 32>}, {pipeline_mode = #tpu.pipeline_mode<synchronous>, transform_indices = @transform_21, window_bounds = array<i64: 1, 32>}, {pipeline_mode = #tpu.pipeline_mode<synchronous>, transform_indices = @transform_22, window_bounds = array<i64: 32, 32>}, {pipeline_mode = #tpu.pipeline_mode<synchronous>, transform_indices = @transform_23, window_bounds = array<i64: 1, 32>}, {pipeline_mode = #tpu.pipeline_mode<synchronous>, transform_indices = @transform_24, window_bounds = array<i64: 8, 32>}, {pipeline_mode = #tpu.pipeline_mode<synchronous>, transform_indices = @transform_25, window_bounds = array<i64: 8, 3>}]} {
    %c0_i32 = arith.constant 0 : i32
    %0 = arith.cmpi eq, %arg0, %c0_i32 : i32
    %1 = arith.extui %0 : i1 to i32
    %c0_i32_0 = arith.constant 0 : i32
    %2 = arith.cmpi ne, %1, %c0_i32_0 : i32
    scf.if %2 {
      %cst_51 = arith.constant 0.000000e+00 : f32
      %79 = vector.broadcast %cst_51 : f32 to vector<8x32xf32>
      %c0_52 = arith.constant 0 : index
      %c0_53 = arith.constant 0 : index
      %80 = vector.load %arg27[%c0_52, %c0_53] : memref<8x32xf32, #tpu.memory_space<vmem>>, vector<8x32xf32>
      tpu.vector_store %arg27[%c0_52, %c0_53], %79 {strides = array<i32>} : memref<8x32xf32, #tpu.memory_space<vmem>>, vector<8x32xf32>,
      %cst_54 = arith.constant 0.000000e+00 : f32
      %81 = vector.broadcast %cst_54 : f32 to vector<8x3xf32>
      %c0_55 = arith.constant 0 : index
      %c0_56 = arith.constant 0 : index
      %82 = vector.load %arg28[%c0_55, %c0_56] : memref<8x3xf32, #tpu.memory_space<vmem>>, vector<8x3xf32>
      tpu.vector_store %arg28[%c0_55, %c0_56], %81 {strides = array<i32>} : memref<8x3xf32, #tpu.memory_space<vmem>>, vector<8x3xf32>,
    } else {
    }
    %c0 = arith.constant 0 : index
    %c0_1 = arith.constant 0 : index
    %3 = vector.load %arg1[%c0, %c0_1] : memref<8x1xi32, #tpu.memory_space<vmem>>, vector<8x1xi32>
    %c0_2 = arith.constant 0 : index
    %c0_3 = arith.constant 0 : index
    %4 = vector.load %arg2[%c0_2, %c0_3] : memref<8x1xi32, #tpu.memory_space<vmem>>, vector<8x1xi32>
    %c0_4 = arith.constant 0 : index
    %c0_5 = arith.constant 0 : index
    %5 = vector.load %arg3[%c0_4, %c0_5] : memref<8x32xf32, #tpu.memory_space<vmem>>, vector<8x32xf32>
    %c0_6 = arith.constant 0 : index
    %c0_7 = arith.constant 0 : index
    %6 = vector.load %arg4[%c0_6, %c0_7] : memref<8x3xf32, #tpu.memory_space<vmem>>, vector<8x3xf32>
    %7 = tpu.iota {dimensions = array<i32: 1>} : vector<8x8xi32>
    %8 = vector.broadcast %3 : vector<8x1xi32> to vector<8x8xi32>
    %9 = arith.cmpi eq, %8, %7 : vector<8x8xi32>
    %10 = arith.extui %9 : vector<8x8xi1> to vector<8x8xi32>
    %11 = arith.sitofp %10 : vector<8x8xi32> to vector<8x8xf32>
    %12 = vector.broadcast %4 : vector<8x1xi32> to vector<8x8xi32>
    %13 = arith.cmpi eq, %12, %7 : vector<8x8xi32>
    %14 = arith.extui %13 : vector<8x8xi1> to vector<8x8xi32>
    %15 = arith.sitofp %14 : vector<8x8xi32> to vector<8x8xf32>
    %cst = arith.constant dense<0.000000e+00> : vector<8x3xf32>
    %16 = tpu.matmul %11, %6, %cst {dimension_numbers = #tpu.dot_dimension_numbers<[1], [0], [0], [1], [0, 0, 1, 1], [], []>} : vector<8x8xf32>, vector<8x3xf32>, vector<8x3xf32> -> vector<8x3xf32>
    %cst_8 = arith.constant dense<0.000000e+00> : vector<8x3xf32>
    %17 = tpu.matmul %15, %6, %cst_8 {dimension_numbers = #tpu.dot_dimension_numbers<[1], [0], [0], [1], [0, 0, 1, 1], [], []>} : vector<8x8xf32>, vector<8x3xf32>, vector<8x3xf32> -> vector<8x3xf32>
    %18 = arith.subf %16, %17 : vector<8x3xf32>
    %19 = arith.mulf %18, %18 : vector<8x3xf32>
    %cst_9 = arith.constant dense<0.000000e+00> : vector<8xf32>
    %20 = vector.multi_reduction <add>, %19, %cst_9 [1] : vector<8x3xf32> to vector<8xf32>
    %21 = vector.shape_cast %20 : vector<8xf32> to vector<8x1xf32>
    %cst_10 = arith.constant dense<0.000000e+00> : vector<8x32xf32>
    %22 = tpu.matmul %11, %5, %cst_10 {dimension_numbers = #tpu.dot_dimension_numbers<[1], [0], [0], [1], [0, 0, 1, 1], [], []>} : vector<8x8xf32>, vector<8x32xf32>, vector<8x32xf32> -> vector<8x32xf32>
    %cst_11 = arith.constant dense<0.000000e+00> : vector<8x32xf32>
    %23 = tpu.matmul %15, %5, %cst_11 {dimension_numbers = #tpu.dot_dimension_numbers<[1], [0], [0], [1], [0, 0, 1, 1], [], []>} : vector<8x8xf32>, vector<8x32xf32>, vector<8x32xf32> -> vector<8x32xf32>
    %24 = arith.truncf %22 : vector<8x32xf32> to vector<8x32xbf16>
    %c0_12 = arith.constant 0 : index
    %c0_13 = arith.constant 0 : index
    %25 = vector.load %arg7[%c0_12, %c0_13] : memref<32x32xbf16, #tpu.memory_space<vmem>>, vector<32x32xbf16>
    %cst_14 = arith.constant dense<0.000000e+00> : vector<8x32xf32>
    %26 = tpu.matmul %24, %25, %cst_14 {dimension_numbers = #tpu.dot_dimension_numbers<[1], [0], [0], [1], [0, 0, 1, 1], [], []>} : vector<8x32xbf16>, vector<32x32xbf16>, vector<8x32xf32> -> vector<8x32xf32>
    %27 = arith.truncf %23 : vector<8x32xf32> to vector<8x32xbf16>
    %c0_15 = arith.constant 0 : index
    %c0_16 = arith.constant 0 : index
    %28 = vector.load %arg8[%c0_15, %c0_16] : memref<32x32xbf16, #tpu.memory_space<vmem>>, vector<32x32xbf16>
    %cst_17 = arith.constant dense<0.000000e+00> : vector<8x32xf32>
    %29 = tpu.matmul %27, %28, %cst_17 {dimension_numbers = #tpu.dot_dimension_numbers<[1], [0], [0], [1], [0, 0, 1, 1], [], []>} : vector<8x32xbf16>, vector<32x32xbf16>, vector<8x32xf32> -> vector<8x32xf32>
    %30 = arith.addf %26, %29 : vector<8x32xf32>
    %c0_18 = arith.constant 0 : index
    %c0_19 = arith.constant 0 : index
    %31 = vector.load %arg9[%c0_18, %c0_19] : memref<1x32xf32, #tpu.memory_space<vmem>>, vector<1x32xf32>
    %32 = vector.broadcast %21 : vector<8x1xf32> to vector<8x32xf32>
    %33 = vector.broadcast %31 : vector<1x32xf32> to vector<8x32xf32>
    %34 = arith.mulf %32, %33 : vector<8x32xf32>
    %35 = arith.addf %30, %34 : vector<8x32xf32>
    %c0_20 = arith.constant 0 : index
    %c0_21 = arith.constant 0 : index
    %36 = vector.load %arg10[%c0_20, %c0_21] : memref<1x32xf32, #tpu.memory_space<vmem>>, vector<1x32xf32>
    %37 = vector.broadcast %36 : vector<1x32xf32> to vector<8x32xf32>
    %38 = arith.addf %35, %37 : vector<8x32xf32>
    %cst_22 = arith.constant 0.000000e+00 : f32
    %39 = vector.broadcast %cst_22 : f32 to vector<8x32xf32>
    %40 = arith.maximumf %38, %39 : vector<8x32xf32>
    %41 = arith.truncf %40 : vector<8x32xf32> to vector<8x32xbf16>
    %c0_23 = arith.constant 0 : index
    %c0_24 = arith.constant 0 : index
    %42 = vector.load %arg11[%c0_23, %c0_24] : memref<32x32xbf16, #tpu.memory_space<vmem>>, vector<32x32xbf16>
    %cst_25 = arith.constant dense<0.000000e+00> : vector<8x32xf32>
    %43 = tpu.matmul %41, %42, %cst_25 {dimension_numbers = #tpu.dot_dimension_numbers<[1], [0], [0], [1], [0, 0, 1, 1], [], []>} : vector<8x32xbf16>, vector<32x32xbf16>, vector<8x32xf32> -> vector<8x32xf32>
    %c0_26 = arith.constant 0 : index
    %c0_27 = arith.constant 0 : index
    %44 = vector.load %arg12[%c0_26, %c0_27] : memref<1x32xf32, #tpu.memory_space<vmem>>, vector<1x32xf32>
    %45 = vector.broadcast %44 : vector<1x32xf32> to vector<8x32xf32>
    %46 = arith.addf %43, %45 : vector<8x32xf32>
    %cst_28 = arith.constant 0.000000e+00 : f32
    %47 = vector.broadcast %cst_28 : f32 to vector<8x32xf32>
    %48 = arith.maximumf %46, %47 : vector<8x32xf32>
    %49 = arith.truncf %48 : vector<8x32xf32> to vector<8x32xbf16>
    %c0_29 = arith.constant 0 : index
    %c0_30 = arith.constant 0 : index
    %50 = vector.load %arg13[%c0_29, %c0_30] : memref<32x32xbf16, #tpu.memory_space<vmem>>, vector<32x32xbf16>
    %cst_31 = arith.constant dense<0.000000e+00> : vector<8x32xf32>
    %51 = tpu.matmul %49, %50, %cst_31 {dimension_numbers = #tpu.dot_dimension_numbers<[1], [0], [0], [1], [0, 0, 1, 1], [], []>} : vector<8x32xbf16>, vector<32x32xbf16>, vector<8x32xf32> -> vector<8x32xf32>
    %c0_32 = arith.constant 0 : index
    %c0_33 = arith.constant 0 : index
    %52 = vector.load %arg14[%c0_32, %c0_33] : memref<1x32xf32, #tpu.memory_space<vmem>>, vector<1x32xf32>
    %53 = vector.broadcast %52 : vector<1x32xf32> to vector<8x32xf32>
    %54 = arith.addf %51, %53 : vector<8x32xf32>
    %cst_34 = arith.constant 0.000000e+00 : f32
    %55 = vector.broadcast %cst_34 : f32 to vector<8x32xf32>
    %56 = arith.maximumf %54, %55 : vector<8x32xf32>
    %c0_35 = arith.constant 0 : index
    %c0_36 = arith.constant 0 : index
    %57 = vector.load %arg15[%c0_35, %c0_36] : memref<1x32xf32, #tpu.memory_space<vmem>>, vector<1x32xf32>
    %58 = vector.broadcast %57 : vector<1x32xf32> to vector<8x32xf32>
    %59 = arith.mulf %56, %58 : vector<8x32xf32>
    %cst_37 = arith.constant dense<0.000000e+00> : vector<8xf32>
    %60 = vector.multi_reduction <add>, %59, %cst_37 [1] : vector<8x32xf32> to vector<8xf32>
    %61 = vector.shape_cast %60 : vector<8xf32> to vector<8x1xf32>
    %62 = vector.broadcast %61 : vector<8x1xf32> to vector<8x3xf32>
    %63 = arith.mulf %18, %62 : vector<8x3xf32>
    %cst_38 = arith.constant -1.000000e+02 : f32
    %cst_39 = arith.constant 1.000000e+02 : f32
    %64 = vector.broadcast %cst_38 : f32 to vector<8x3xf32>
    %65 = arith.maximumf %64, %63 : vector<8x3xf32>
    %66 = vector.broadcast %cst_39 : f32 to vector<8x3xf32>
    %67 = arith.minimumf %66, %65 : vector<8x3xf32>
    %c0_40 = arith.constant 0 : index
    %c0_41 = arith.constant 0 : index
    %68 = vector.load %arg27[%c0_40, %c0_41] : memref<8x32xf32, #tpu.memory_space<vmem>>, vector<8x32xf32>
    %cst_42 = arith.constant dense<0.000000e+00> : vector<8x32xf32>
    %69 = tpu.matmul %11, %48, %cst_42 {dimension_numbers = #tpu.dot_dimension_numbers<[0], [0], [1], [1], [0, 1, 1, 1], [], []>} : vector<8x8xf32>, vector<8x32xf32>, vector<8x32xf32> -> vector<8x32xf32>
    %70 = arith.addf %68, %69 : vector<8x32xf32>
    %c0_43 = arith.constant 0 : index
    %c0_44 = arith.constant 0 : index
    %71 = vector.load %arg27[%c0_43, %c0_44] : memref<8x32xf32, #tpu.memory_space<vmem>>, vector<8x32xf32>
    tpu.vector_store %arg27[%c0_43, %c0_44], %70 {strides = array<i32>} : memref<8x32xf32, #tpu.memory_space<vmem>>, vector<8x32xf32>,
    %c0_45 = arith.constant 0 : index
    %c0_46 = arith.constant 0 : index
    %72 = vector.load %arg28[%c0_45, %c0_46] : memref<8x3xf32, #tpu.memory_space<vmem>>, vector<8x3xf32>
    %cst_47 = arith.constant dense<0.000000e+00> : vector<8x3xf32>
    %73 = tpu.matmul %11, %67, %cst_47 {dimension_numbers = #tpu.dot_dimension_numbers<[0], [0], [1], [1], [0, 1, 1, 1], [], []>} : vector<8x8xf32>, vector<8x3xf32>, vector<8x3xf32> -> vector<8x3xf32>
    %74 = arith.addf %72, %73 : vector<8x3xf32>
    %c0_48 = arith.constant 0 : index
    %c0_49 = arith.constant 0 : index
    %75 = vector.load %arg28[%c0_48, %c0_49] : memref<8x3xf32, #tpu.memory_space<vmem>>, vector<8x3xf32>
    tpu.vector_store %arg28[%c0_48, %c0_49], %74 {strides = array<i32>} : memref<8x3xf32, #tpu.memory_space<vmem>>, vector<8x3xf32>,
    %c1_i32 = arith.constant 1 : i32
    %76 = arith.cmpi eq, %arg0, %c1_i32 : i32
    %77 = arith.extui %76 : i1 to i32
    %c0_i32_50 = arith.constant 0 : i32
    %78 = arith.cmpi ne, %77, %c0_i32_50 : i32
    scf.if %78 {
      %c0_51 = arith.constant 0 : index
      %c0_52 = arith.constant 0 : index
      %79 = vector.load %arg5[%c0_51, %c0_52] : memref<8x3xf32, #tpu.memory_space<vmem>>, vector<8x3xf32>
      %c0_53 = arith.constant 0 : index
      %c0_54 = arith.constant 0 : index
      %80 = vector.load %arg6[%c0_53, %c0_54] : memref<8x1xf32, #tpu.memory_space<vmem>>, vector<8x1xf32>
      %cst_55 = arith.constant 1.000000e+00 : f32
      %81 = vector.broadcast %cst_55 : f32 to vector<8x1xf32>
      %82 = arith.maximumf %80, %81 : vector<8x1xf32>
      %83 = tpu.reciprocal %82 {approx = true} : vector<8x1xf32> -> vector<8x1xf32>
      %c0_56 = arith.constant 0 : index
      %c0_57 = arith.constant 0 : index
      %84 = vector.load %arg28[%c0_56, %c0_57] : memref<8x3xf32, #tpu.memory_space<vmem>>, vector<8x3xf32>
      %85 = vector.broadcast %83 : vector<8x1xf32> to vector<8x3xf32>
      %86 = arith.mulf %84, %85 : vector<8x3xf32>
      %cst_58 = arith.constant 1.000000e+00 : f32
      %87 = vector.broadcast %cst_58 : f32 to vector<8x3xf32>
      %88 = arith.mulf %86, %87 : vector<8x3xf32>
      %89 = arith.addf %6, %88 : vector<8x3xf32>
      %90 = arith.truncf %5 : vector<8x32xf32> to vector<8x32xbf16>
      %c0_59 = arith.constant 0 : index
      %c0_60 = arith.constant 0 : index
      %91 = vector.load %arg16[%c0_59, %c0_60] : memref<32x32xbf16, #tpu.memory_space<vmem>>, vector<32x32xbf16>
      %cst_61 = arith.constant dense<0.000000e+00> : vector<8x32xf32>
      %92 = tpu.matmul %90, %91, %cst_61 {dimension_numbers = #tpu.dot_dimension_numbers<[1], [0], [0], [1], [0, 0, 1, 1], [], []>} : vector<8x32xbf16>, vector<32x32xbf16>, vector<8x32xf32> -> vector<8x32xf32>
      %c0_62 = arith.constant 0 : index
      %c0_63 = arith.constant 0 : index
      %93 = vector.load %arg17[%c0_62, %c0_63] : memref<1x32xf32, #tpu.memory_space<vmem>>, vector<1x32xf32>
      %94 = vector.broadcast %93 : vector<1x32xf32> to vector<8x32xf32>
      %95 = arith.addf %92, %94 : vector<8x32xf32>
      %cst_64 = arith.constant 0.000000e+00 : f32
      %96 = vector.broadcast %cst_64 : f32 to vector<8x32xf32>
      %97 = arith.maximumf %95, %96 : vector<8x32xf32>
      %c0_65 = arith.constant 0 : index
      %c0_66 = arith.constant 0 : index
      %98 = vector.load %arg18[%c0_65, %c0_66] : memref<1x32xf32, #tpu.memory_space<vmem>>, vector<1x32xf32>
      %99 = vector.broadcast %98 : vector<1x32xf32> to vector<8x32xf32>
      %100 = arith.mulf %97, %99 : vector<8x32xf32>
      %cst_67 = arith.constant dense<0.000000e+00> : vector<8xf32>
      %101 = vector.multi_reduction <add>, %100, %cst_67 [1] : vector<8x32xf32> to vector<8xf32>
      %102 = vector.shape_cast %101 : vector<8xf32> to vector<8x1xf32>
      %c0_68 = arith.constant 0 : index
      %c0_69 = arith.constant 0 : index
      %103 = vector.load %arg19[%c0_68, %c0_69] : memref<1x1xf32, #tpu.memory_space<vmem>>, vector<1x1xf32>
      %104 = vector.broadcast %103 : vector<1x1xf32> to vector<8x1xf32>
      %105 = arith.addf %102, %104 : vector<8x1xf32>
      %106 = vector.broadcast %105 : vector<8x1xf32> to vector<8x3xf32>
      %107 = arith.mulf %106, %79 : vector<8x3xf32>
      %108 = arith.addf %89, %107 : vector<8x3xf32>
      %c0_70 = arith.constant 0 : index
      %c0_71 = arith.constant 0 : index
      %109 = vector.load %arg26[%c0_70, %c0_71] : memref<8x3xf32, #tpu.memory_space<vmem>>, vector<8x3xf32>
      tpu.vector_store %arg26[%c0_70, %c0_71], %108 {strides = array<i32>} : memref<8x3xf32, #tpu.memory_space<vmem>>, vector<8x3xf32>,
      %c0_72 = arith.constant 0 : index
      %c0_73 = arith.constant 0 : index
      %110 = vector.load %arg20[%c0_72, %c0_73] : memref<32x32xbf16, #tpu.memory_space<vmem>>, vector<32x32xbf16>
      %cst_74 = arith.constant dense<0.000000e+00> : vector<8x32xf32>
      %111 = tpu.matmul %90, %110, %cst_74 {dimension_numbers = #tpu.dot_dimension_numbers<[1], [0], [0], [1], [0, 0, 1, 1], [], []>} : vector<8x32xbf16>, vector<32x32xbf16>, vector<8x32xf32> -> vector<8x32xf32>
      %c0_75 = arith.constant 0 : index
      %c0_76 = arith.constant 0 : index
      %112 = vector.load %arg27[%c0_75, %c0_76] : memref<8x32xf32, #tpu.memory_space<vmem>>, vector<8x32xf32>
      %113 = arith.truncf %112 : vector<8x32xf32> to vector<8x32xbf16>
      %c0_77 = arith.constant 0 : index
      %c0_78 = arith.constant 0 : index
      %114 = vector.load %arg21[%c0_77, %c0_78] : memref<32x32xbf16, #tpu.memory_space<vmem>>, vector<32x32xbf16>
      %cst_79 = arith.constant dense<0.000000e+00> : vector<8x32xf32>
      %115 = tpu.matmul %113, %114, %cst_79 {dimension_numbers = #tpu.dot_dimension_numbers<[1], [0], [0], [1], [0, 0, 1, 1], [], []>} : vector<8x32xbf16>, vector<32x32xbf16>, vector<8x32xf32> -> vector<8x32xf32>
      %116 = arith.addf %111, %115 : vector<8x32xf32>
      %c0_80 = arith.constant 0 : index
      %c0_81 = arith.constant 0 : index
      %117 = vector.load %arg22[%c0_80, %c0_81] : memref<1x32xf32, #tpu.memory_space<vmem>>, vector<1x32xf32>
      %118 = vector.broadcast %117 : vector<1x32xf32> to vector<8x32xf32>
      %119 = arith.addf %116, %118 : vector<8x32xf32>
      %cst_82 = arith.constant 0.000000e+00 : f32
      %120 = vector.broadcast %cst_82 : f32 to vector<8x32xf32>
      %121 = arith.maximumf %119, %120 : vector<8x32xf32>
      %122 = arith.truncf %121 : vector<8x32xf32> to vector<8x32xbf16>
      %c0_83 = arith.constant 0 : index
      %c0_84 = arith.constant 0 : index
      %123 = vector.load %arg23[%c0_83, %c0_84] : memref<32x32xbf16, #tpu.memory_space<vmem>>, vector<32x32xbf16>
      %cst_85 = arith.constant dense<0.000000e+00> : vector<8x32xf32>
      %124 = tpu.matmul %122, %123, %cst_85 {dimension_numbers = #tpu.dot_dimension_numbers<[1], [0], [0], [1], [0, 0, 1, 1], [], []>} : vector<8x32xbf16>, vector<32x32xbf16>, vector<8x32xf32> -> vector<8x32xf32>
      %125 = arith.addf %5, %124 : vector<8x32xf32>
      %c0_86 = arith.constant 0 : index
      %c0_87 = arith.constant 0 : index
      %126 = vector.load %arg24[%c0_86, %c0_87] : memref<1x32xf32, #tpu.memory_space<vmem>>, vector<1x32xf32>
      %127 = vector.broadcast %126 : vector<1x32xf32> to vector<8x32xf32>
      %128 = arith.addf %125, %127 : vector<8x32xf32>
      %c0_88 = arith.constant 0 : index
      %c0_89 = arith.constant 0 : index
      %129 = vector.load %arg25[%c0_88, %c0_89] : memref<8x32xf32, #tpu.memory_space<vmem>>, vector<8x32xf32>
      tpu.vector_store %arg25[%c0_88, %c0_89], %128 {strides = array<i32>} : memref<8x32xf32, #tpu.memory_space<vmem>>, vector<8x32xf32>,
    } else {
    }
    return
  }
  func.func @transform_0(%arg0: i32) -> (i32, i32) {
    %c0_i32 = arith.constant 0 : i32
    %c0_i32_0 = arith.constant 0 : i32
    return %arg0, %c0_i32 : i32, i32
  }
  func.func @transform_1(%arg0: i32) -> (i32, i32) {
    %c0_i32 = arith.constant 0 : i32
    %c0_i32_0 = arith.constant 0 : i32
    return %arg0, %c0_i32 : i32, i32
  }
  func.func @transform_2(%arg0: i32) -> (i32, i32) {
    %c0_i32 = arith.constant 0 : i32
    %c0_i32_0 = arith.constant 0 : i32
    %c0_i32_1 = arith.constant 0 : i32
    return %c0_i32, %c0_i32_0 : i32, i32
  }
  func.func @transform_3(%arg0: i32) -> (i32, i32) {
    %c0_i32 = arith.constant 0 : i32
    %c0_i32_0 = arith.constant 0 : i32
    %c0_i32_1 = arith.constant 0 : i32
    return %c0_i32, %c0_i32_0 : i32, i32
  }
  func.func @transform_4(%arg0: i32) -> (i32, i32) {
    %c0_i32 = arith.constant 0 : i32
    %c0_i32_0 = arith.constant 0 : i32
    %c0_i32_1 = arith.constant 0 : i32
    return %c0_i32, %c0_i32_0 : i32, i32
  }
  func.func @transform_5(%arg0: i32) -> (i32, i32) {
    %c0_i32 = arith.constant 0 : i32
    %c0_i32_0 = arith.constant 0 : i32
    %c0_i32_1 = arith.constant 0 : i32
    return %c0_i32, %c0_i32_0 : i32, i32
  }
  func.func @transform_6(%arg0: i32) -> (i32, i32) {
    %c0_i32 = arith.constant 0 : i32
    %c0_i32_0 = arith.constant 0 : i32
    %c0_i32_1 = arith.constant 0 : i32
    return %c0_i32, %c0_i32_0 : i32, i32
  }
  func.func @transform_7(%arg0: i32) -> (i32, i32) {
    %c0_i32 = arith.constant 0 : i32
    %c0_i32_0 = arith.constant 0 : i32
    %c0_i32_1 = arith.constant 0 : i32
    return %c0_i32, %c0_i32_0 : i32, i32
  }
  func.func @transform_8(%arg0: i32) -> (i32, i32) {
    %c0_i32 = arith.constant 0 : i32
    %c0_i32_0 = arith.constant 0 : i32
    %c0_i32_1 = arith.constant 0 : i32
    return %c0_i32, %c0_i32_0 : i32, i32
  }
  func.func @transform_9(%arg0: i32) -> (i32, i32) {
    %c0_i32 = arith.constant 0 : i32
    %c0_i32_0 = arith.constant 0 : i32
    %c0_i32_1 = arith.constant 0 : i32
    return %c0_i32, %c0_i32_0 : i32, i32
  }
  func.func @transform_10(%arg0: i32) -> (i32, i32) {
    %c0_i32 = arith.constant 0 : i32
    %c0_i32_0 = arith.constant 0 : i32
    %c0_i32_1 = arith.constant 0 : i32
    return %c0_i32, %c0_i32_0 : i32, i32
  }
  func.func @transform_11(%arg0: i32) -> (i32, i32) {
    %c0_i32 = arith.constant 0 : i32
    %c0_i32_0 = arith.constant 0 : i32
    %c0_i32_1 = arith.constant 0 : i32
    return %c0_i32, %c0_i32_0 : i32, i32
  }
  func.func @transform_12(%arg0: i32) -> (i32, i32) {
    %c0_i32 = arith.constant 0 : i32
    %c0_i32_0 = arith.constant 0 : i32
    %c0_i32_1 = arith.constant 0 : i32
    return %c0_i32, %c0_i32_0 : i32, i32
  }
  func.func @transform_13(%arg0: i32) -> (i32, i32) {
    %c0_i32 = arith.constant 0 : i32
    %c0_i32_0 = arith.constant 0 : i32
    %c0_i32_1 = arith.constant 0 : i32
    return %c0_i32, %c0_i32_0 : i32, i32
  }
  func.func @transform_14(%arg0: i32) -> (i32, i32) {
    %c0_i32 = arith.constant 0 : i32
    %c0_i32_0 = arith.constant 0 : i32
    %c0_i32_1 = arith.constant 0 : i32
    return %c0_i32, %c0_i32_0 : i32, i32
  }
  func.func @transform_15(%arg0: i32) -> (i32, i32) {
    %c0_i32 = arith.constant 0 : i32
    %c0_i32_0 = arith.constant 0 : i32
    %c0_i32_1 = arith.constant 0 : i32
    return %c0_i32, %c0_i32_0 : i32, i32
  }
  func.func @transform_16(%arg0: i32) -> (i32, i32) {
    %c0_i32 = arith.constant 0 : i32
    %c0_i32_0 = arith.constant 0 : i32
    %c0_i32_1 = arith.constant 0 : i32
    return %c0_i32, %c0_i32_0 : i32, i32
  }
  func.func @transform_17(%arg0: i32) -> (i32, i32) {
    %c0_i32 = arith.constant 0 : i32
    %c0_i32_0 = arith.constant 0 : i32
    %c0_i32_1 = arith.constant 0 : i32
    return %c0_i32, %c0_i32_0 : i32, i32
  }
  func.func @transform_18(%arg0: i32) -> (i32, i32) {
    %c0_i32 = arith.constant 0 : i32
    %c0_i32_0 = arith.constant 0 : i32
    %c0_i32_1 = arith.constant 0 : i32
    return %c0_i32, %c0_i32_0 : i32, i32
  }
  func.func @transform_19(%arg0: i32) -> (i32, i32) {
    %c0_i32 = arith.constant 0 : i32
    %c0_i32_0 = arith.constant 0 : i32
    %c0_i32_1 = arith.constant 0 : i32
    return %c0_i32, %c0_i32_0 : i32, i32
  }
  func.func @transform_20(%arg0: i32) -> (i32, i32) {
    %c0_i32 = arith.constant 0 : i32
    %c0_i32_0 = arith.constant 0 : i32
    %c0_i32_1 = arith.constant 0 : i32
    return %c0_i32, %c0_i32_0 : i32, i32
  }
  func.func @transform_21(%arg0: i32) -> (i32, i32) {
    %c0_i32 = arith.constant 0 : i32
    %c0_i32_0 = arith.constant 0 : i32
    %c0_i32_1 = arith.constant 0 : i32
    return %c0_i32, %c0_i32_0 : i32, i32
  }
  func.func @transform_22(%arg0: i32) -> (i32, i32) {
    %c0_i32 = arith.constant 0 : i32
    %c0_i32_0 = arith.constant 0 : i32
    %c0_i32_1 = arith.constant 0 : i32
    return %c0_i32, %c0_i32_0 : i32, i32
  }
  func.func @transform_23(%arg0: i32) -> (i32, i32) {
    %c0_i32 = arith.constant 0 : i32
    %c0_i32_0 = arith.constant 0 : i32
    %c0_i32_1 = arith.constant 0 : i32
    return %c0_i32, %c0_i32_0 : i32, i32
  }
  func.func @transform_24(%arg0: i32) -> (i32, i32) {
    %c0_i32 = arith.constant 0 : i32
    %c0_i32_0 = arith.constant 0 : i32
    %c0_i32_1 = arith.constant 0 : i32
    return %c0_i32, %c0_i32_0 : i32, i32
  }
  func.func @transform_25(%arg0: i32) -> (i32, i32) {
    %c0_i32 = arith.constant 0 : i32
    %c0_i32_0 = arith.constant 0 : i32
    %c0_i32_1 = arith.constant 0 : i32
    return %c0_i32, %c0_i32_0 : i32, i32
  }
}

</mosaic_0001>

<llo_original>
// kernel: tpu_custom_call.1
$region0: #{tpu_custom_call.1}
  #allocation0 [shape = 'u32[]', space=smem, size = 0x4, offset = 0x4, fixed_abs, tag = 'smem constant byte address 0x4 - core index']
  #allocation1 [shape = 'u32[144,128]{1,0:T(1,128)}', space=vmem, size = 0x12000, scoped, tag = 'internal scratch']
  #allocation2 [shape = 'f32[8,32]{1,0:T(8,128)}', space=vmem, size = 0x1000, scoped, tag = 'scratch operand']
  #allocation3 [shape = 'f32[8,3]{1,0:T(8,128)}', space=vmem, size = 0x1000, scoped, tag = 'scratch operand']
  #allocation4 [shape = 'f32[1,1]{1,0:T(1,128)S(1)}', space=vmem, size = 0x200, scoped, tag = 'scoped memory for tpu_custom_call.1']
  %s0 = inlined_call_operand.vmem [shape: s32[16,1], index: 0, kind: input, shape index: {}]
  %s1 = inlined_call_operand.vmem [shape: s32[16,1], index: 1, kind: input, shape index: {}]
  %s2 = inlined_call_operand.hbm [shape: f32[8,32], index: 2, kind: input, shape index: {}]
  %s3 = inlined_call_operand.vmem [shape: f32[8,3], index: 3, kind: input, shape index: {}]
  %s4 = inlined_call_operand.vmem [shape: f32[8,3], index: 4, kind: input, shape index: {}]
  %s5 = inlined_call_operand.vmem [shape: f32[8,1], index: 5, kind: input, shape index: {}]
  %s6 = inlined_call_operand.vmem [shape: bf16[32,32], index: 6, kind: input, shape index: {}]
  %s7 = inlined_call_operand.vmem [shape: bf16[32,32], index: 7, kind: input, shape index: {}]
  %s8 = inlined_call_operand.hbm [shape: f32[1,32], index: 8, kind: input, shape index: {}]
  %s9 = inlined_call_operand.hbm [shape: f32[1,32], index: 9, kind: input, shape index: {}]
  %s10 = inlined_call_operand.vmem [shape: bf16[32,32], index: 10, kind: input, shape index: {}]
  %s11 = inlined_call_operand.hbm [shape: f32[1,32], index: 11, kind: input, shape index: {}]
  %s12 = inlined_call_operand.vmem [shape: bf16[32,32], index: 12, kind: input, shape index: {}]
  %s13 = inlined_call_operand.vmem [shape: f32[1,32], index: 13, kind: input, shape index: {}]
  %s14 = inlined_call_operand.vmem [shape: f32[1,32], index: 14, kind: input, shape index: {}]
  %s15 = inlined_call_operand.vmem [shape: bf16[32,32], index: 15, kind: input, shape index: {}]
  %s16 = inlined_call_operand.vmem [shape: f32[1,32], index: 16, kind: input, shape index: {}]
  %s17 = inlined_call_operand.vmem [shape: f32[1,32], index: 17, kind: input, shape index: {}]
  %s18 = inlined_call_operand.<no memory space> [shape: f32[1,1], index: 18, kind: input, shape index: {}]
  %s19 = inlined_call_operand.vmem [shape: bf16[32,32], index: 19, kind: input, shape index: {}]
  %s20 = inlined_call_operand.vmem [shape: bf16[32,32], index: 20, kind: input, shape index: {}]
  %s21 = inlined_call_operand.vmem [shape: f32[1,32], index: 21, kind: input, shape index: {}]
  %s22 = inlined_call_operand.vmem [shape: bf16[32,32], index: 22, kind: input, shape index: {}]
  %s23 = inlined_call_operand.vmem [shape: f32[1,32], index: 23, kind: input, shape index: {}]
  %s24 = inlined_call_operand.hbm [shape: f32[8,32], index: 24, kind: output, shape index: {0}]
  %s25 = inlined_call_operand.vmem [shape: f32[8,3], index: 25, kind: output, shape index: {1}]
  %26 = xla_tuple %s24, %s25
  %s27 = sld [smem:[#allocation0]]
  $region161: #{tpu_custom_call.1} parent=0
    _
  %s29 = ssub.s32 1, %s27
  %s30 = scalar_select 0, %s29, %s27
  %v31 = vstv %s18
  %32 = vst [vmem:[#allocation4] sm:$0x1] %v31
  $region1: #{tpu_custom_call.1} parent=0
    #allocation5 [shape = 'u8[4096]{0}', space=vmem, size = 0x1000, scoped, tag = 'input window, operand 2, single buffered']
    #allocation6 [shape = 's32[2]{0}', space=sflag, size = 0x8, scoped, tag = 'scoped memory for tpu_custom_call.1']
    #allocation7 [shape = 's32[2]{0}', space=sflag, size = 0x8, scoped, tag = 'scoped memory for tpu_custom_call.1']
    #allocation8 [shape = 'u8[512]{0}', space=vmem, size = 0x400, scoped, tag = 'input window, operand 8, single buffered']
    #allocation9 [shape = 's32[1]{0}', space=sflag, size = 0x4, scoped, tag = 'scoped memory for tpu_custom_call.1']
    #allocation10 [shape = 'u8[512]{0}', space=vmem, size = 0x400, scoped, tag = 'input window, operand 9, single buffered']
    #allocation11 [shape = 'u8[512]{0}', space=vmem, size = 0x400, scoped, tag = 'input window, operand 11, single buffered']
    #allocation12 [shape = 's32[1]{0}', space=sflag, size = 0x4, scoped, tag = 'scoped memory for tpu_custom_call.1']
    #allocation13 [shape = 'u8[4096]{0}', space=vmem, size = 0x1000, scoped, tag = 'output window, operand 0, single buffered']
    %33 = vsyncpa [#allocation6], 0
    %34 = vsyncpa [#allocation9], 0
    %35 = vsyncpa [#allocation12], 0
    %36 = vsyncpa [#allocation7], 0
    loop: start=0, step=1, limit=4
    $region2: #{tpu_custom_call.1} parent=1 // loop_pre_header
      _
    $region3: #{tpu_custom_call.1} parent=1 // loop_header
      %s38 = sphi 0, %s42
      %p39 = scmp.ge.s32.totalorder %s38, 4
      %s48 = sphi 0, %s50
      %s51 = sphi 0, %s48
      %s52 = sphi 0, %s51
      %s68 = sphi 0, %s52
      %s74 = sphi 0, %s76
      %s77 = sphi 0, %s74
      %s78 = sphi 0, %s77
      %s94 = sphi 0, %s78
      %s98 = sphi 0, %s98
      %s100 = sphi 0, %s98
      %s101 = sphi 0, %s100
      %s115 = sphi 0, %s101
      %s119 = sphi 0, %s119
      %s121 = sphi 0, %s119
      %s122 = sphi 0, %s121
      %s136 = sphi 0, %s122
      %s140 = sphi 0, %s140
      %s142 = sphi 0, %s140
      %s143 = sphi 0, %s142
      %s157 = sphi 0, %s143
      %s161 = sphi 0, %s161
      %s163 = sphi 0, %s161
      %s164 = sphi 0, %s163
      %s178 = sphi 0, %s164
      %s182 = sphi 0, %s182
      %s184 = sphi 0, %s182
      %s185 = sphi 0, %s184
      %s199 = sphi 0, %s185
      %s203 = sphi 0, %s203
      %s205 = sphi 0, %s203
      %s206 = sphi 0, %s205
      %s220 = sphi 0, %s206
      %s224 = sphi 0, %s224
      %s226 = sphi 0, %s224
      %s227 = sphi 0, %s226
      %s241 = sphi 0, %s227
      %s245 = sphi 0, %s245
      %s247 = sphi 0, %s245
      %s248 = sphi 0, %s247
      %s262 = sphi 0, %s248
      %s266 = sphi 0, %s266
      %s268 = sphi 0, %s266
      %s269 = sphi 0, %s268
      %s283 = sphi 0, %s269
      %s287 = sphi 0, %s287
      %s289 = sphi 0, %s287
      %s290 = sphi 0, %s289
      %s304 = sphi 0, %s290
      %s308 = sphi 0, %s308
      %s310 = sphi 0, %s308
      %s311 = sphi 0, %s310
      %s325 = sphi 0, %s311
      %s329 = sphi 0, %s329
      %s331 = sphi 0, %s329
      %s332 = sphi 0, %s331
      %s346 = sphi 0, %s332
      %s350 = sphi 0, %s350
      %s352 = sphi 0, %s350
      %s353 = sphi 0, %s352
      %s367 = sphi 0, %s353
      %s371 = sphi 0, %s371
      %s373 = sphi 0, %s371
      %s374 = sphi 0, %s373
      %s388 = sphi 0, %s374
      %s392 = sphi 0, %s392
      %s394 = sphi 0, %s392
      %s395 = sphi 0, %s394
      %s409 = sphi 0, %s395
      %s413 = sphi 0, %s413
      %s415 = sphi 0, %s413
      %s416 = sphi 0, %s415
      %s430 = sphi 0, %s416
      %s434 = sphi 0, %s434
      %s436 = sphi 0, %s434
      %s437 = sphi 0, %s436
      %s451 = sphi 0, %s437
      %s455 = sphi 0, %s455
      %s457 = sphi 0, %s455
      %s458 = sphi 0, %s457
      %s472 = sphi 0, %s458
      %s476 = sphi 0, %s476
      %s478 = sphi 0, %s476
      %s479 = sphi 0, %s478
      %s493 = sphi 0, %s479
      %s497 = sphi 0, %s497
      %s499 = sphi 0, %s497
      %s500 = sphi 0, %s499
      %s514 = sphi 0, %s500
      %s518 = sphi 0, %s518
      %s520 = sphi 0, %s518
      %s521 = sphi 0, %s520
      %s535 = sphi 0, %s521
      %s539 = sphi 0, %s539
      %s541 = sphi 0, %s539
      %s542 = sphi 0, %s541
      %s556 = sphi 0, %s542
      %s560 = sphi 0, %s560
      %s562 = sphi 0, %s560
      %s563 = sphi 0, %s562
      %s577 = sphi 0, %s563
      %s581 = sphi 0, %s581
      %s583 = sphi 0, %s581
      %s584 = sphi 0, %s583
      %s598 = sphi 0, %s584
    $region4: #{tpu_custom_call.1} parent=1 // loop_header_branch
      %41 = sbr.rel (%p39) target = $region8
    $region5: #{tpu_custom_call.1} parent=1 // loop_body
      %s43 = ssub.s32 %s38, 1
      %s44 = ssub.s32 %s38, 2
      %s45 = sadd.s32 %s38, 1
      %s46 = ssub.s32 %s38, %s45
      %p47 = scmp.eq.s32.totalorder %s46, 0
      %s49 = sadd.s32 %s48, 1
      %s50 = scalar_select %p47, %s48, %s49
      %p53 = pneg %p47
      %p54 = scmp.eq.s32.totalorder %s38, 1
      %p55 = por %p53, %p54
      %p56 = scmp.ne.s32.totalorder %s48, %s51
      %p57 = scmp.eq.s32.totalorder %s38, 0
      %p58 = por %p56, %p57
      %p59 = scmp.ne.s32.totalorder %s48, %s51
      %p60 = scmp.eq.s32.totalorder %s43, 1
      %p61 = por %p59, %p60
      %p62 = scmp.ne.s32.totalorder %s51, %s52
      %p63 = scmp.eq.s32.totalorder %s43, 0
      %p64 = por %p62, %p63
      %p65 = scmp.ne.s32.totalorder %s51, %s52
      %p66 = scmp.eq.s32.totalorder %s44, 1
      %p67 = por %p65, %p66
      %p69 = scmp.ne.s32.totalorder %s52, %s68
      %p70 = scmp.eq.s32.totalorder %s44, 0
      %p71 = por %p69, %p70
      %s72 = ssub.s32 %s38, %s45
      %p73 = scmp.eq.s32.totalorder %s72, 0
      %s75 = sadd.s32 %s74, 1
      %s76 = scalar_select %p73, %s74, %s75
      %p79 = pneg %p73
      %p80 = scmp.eq.s32.totalorder %s38, 1
      %p81 = por %p79, %p80
      %p82 = scmp.ne.s32.totalorder %s74, %s77
      %p83 = scmp.eq.s32.totalorder %s38, 0
      %p84 = por %p82, %p83
      %p85 = scmp.ne.s32.totalorder %s74, %s77
      %p86 = scmp.eq.s32.totalorder %s43, 1
      %p87 = por %p85, %p86
      %p88 = scmp.ne.s32.totalorder %s77, %s78
      %p89 = scmp.eq.s32.totalorder %s43, 0
      %p90 = por %p88, %p89
      %p91 = scmp.ne.s32.totalorder %s77, %s78
      %p92 = scmp.eq.s32.totalorder %s44, 1
      %p93 = por %p91, %p92
      %p95 = scmp.ne.s32.totalorder %s78, %s94
      %p96 = scmp.eq.s32.totalorder %s44, 0
      %p97 = por %p95, %p96
      %s99 = sadd.s32 %s98, 1
      %p102 = scmp.eq.s32.totalorder %s38, 1
      %p103 = scmp.ne.s32.totalorder %s98, %s100
      %p104 = scmp.eq.s32.totalorder %s38, 0
      %p105 = por %p103, %p104
      %p106 = scmp.ne.s32.totalorder %s98, %s100
      %p107 = scmp.eq.s32.totalorder %s43, 1
      %p108 = por %p106, %p107
      %p109 = scmp.ne.s32.totalorder %s100, %s101
      %p110 = scmp.eq.s32.totalorder %s43, 0
      %p111 = por %p109, %p110
      %p112 = scmp.ne.s32.totalorder %s100, %s101
      %p113 = scmp.eq.s32.totalorder %s44, 1
      %p114 = por %p112, %p113
      %p116 = scmp.ne.s32.totalorder %s101, %s115
      %p117 = scmp.eq.s32.totalorder %s44, 0
      %p118 = por %p116, %p117
      %s120 = sadd.s32 %s119, 1
      %p123 = scmp.eq.s32.totalorder %s38, 1
      %p124 = scmp.ne.s32.totalorder %s119, %s121
      %p125 = scmp.eq.s32.totalorder %s38, 0
      %p126 = por %p124, %p125
      %p127 = scmp.ne.s32.totalorder %s119, %s121
      %p128 = scmp.eq.s32.totalorder %s43, 1
      %p129 = por %p127, %p128
      %p130 = scmp.ne.s32.totalorder %s121, %s122
      %p131 = scmp.eq.s32.totalorder %s43, 0
      %p132 = por %p130, %p131
      %p133 = scmp.ne.s32.totalorder %s121, %s122
      %p134 = scmp.eq.s32.totalorder %s44, 1
      %p135 = por %p133, %p134
      %p137 = scmp.ne.s32.totalorder %s122, %s136
      %p138 = scmp.eq.s32.totalorder %s44, 0
      %p139 = por %p137, %p138
      %s141 = sadd.s32 %s140, 1
      %p144 = scmp.eq.s32.totalorder %s38, 1
      %p145 = scmp.ne.s32.totalorder %s140, %s142
      %p146 = scmp.eq.s32.totalorder %s38, 0
      %p147 = por %p145, %p146
      %p148 = scmp.ne.s32.totalorder %s140, %s142
      %p149 = scmp.eq.s32.totalorder %s43, 1
      %p150 = por %p148, %p149
      %p151 = scmp.ne.s32.totalorder %s142, %s143
      %p152 = scmp.eq.s32.totalorder %s43, 0
      %p153 = por %p151, %p152
      %p154 = scmp.ne.s32.totalorder %s142, %s143
      %p155 = scmp.eq.s32.totalorder %s44, 1
      %p156 = por %p154, %p155
      %p158 = scmp.ne.s32.totalorder %s143, %s157
      %p159 = scmp.eq.s32.totalorder %s44, 0
      %p160 = por %p158, %p159
      %s162 = sadd.s32 %s161, 1
      %p165 = scmp.eq.s32.totalorder %s38, 1
      %p166 = scmp.ne.s32.totalorder %s161, %s163
      %p167 = scmp.eq.s32.totalorder %s38, 0
      %p168 = por %p166, %p167
      %p169 = scmp.ne.s32.totalorder %s161, %s163
      %p170 = scmp.eq.s32.totalorder %s43, 1
      %p171 = por %p169, %p170
      %p172 = scmp.ne.s32.totalorder %s163, %s164
      %p173 = scmp.eq.s32.totalorder %s43, 0
      %p174 = por %p172, %p173
      %p175 = scmp.ne.s32.totalorder %s163, %s164
      %p176 = scmp.eq.s32.totalorder %s44, 1
      %p177 = por %p175, %p176
      %p179 = scmp.ne.s32.totalorder %s164, %s178
      %p180 = scmp.eq.s32.totalorder %s44, 0
      %p181 = por %p179, %p180
      %s183 = sadd.s32 %s182, 1
      %p186 = scmp.eq.s32.totalorder %s38, 1
      %p187 = scmp.ne.s32.totalorder %s182, %s184
      %p188 = scmp.eq.s32.totalorder %s38, 0
      %p189 = por %p187, %p188
      %p190 = scmp.ne.s32.totalorder %s182, %s184
      %p191 = scmp.eq.s32.totalorder %s43, 1
      %p192 = por %p190, %p191
      %p193 = scmp.ne.s32.totalorder %s184, %s185
      %p194 = scmp.eq.s32.totalorder %s43, 0
      %p195 = por %p193, %p194
      %p196 = scmp.ne.s32.totalorder %s184, %s185
      %p197 = scmp.eq.s32.totalorder %s44, 1
      %p198 = por %p196, %p197
      %p200 = scmp.ne.s32.totalorder %s185, %s199
      %p201 = scmp.eq.s32.totalorder %s44, 0
      %p202 = por %p200, %p201
      %s204 = sadd.s32 %s203, 1
      %p207 = scmp.eq.s32.totalorder %s38, 1
      %p208 = scmp.ne.s32.totalorder %s203, %s205
      %p209 = scmp.eq.s32.totalorder %s38, 0
      %p210 = por %p208, %p209
      %p211 = scmp.ne.s32.totalorder %s203, %s205
      %p212 = scmp.eq.s32.totalorder %s43, 1
      %p213 = por %p211, %p212
      %p214 = scmp.ne.s32.totalorder %s205, %s206
      %p215 = scmp.eq.s32.totalorder %s43, 0
      %p216 = por %p214, %p215
      %p217 = scmp.ne.s32.totalorder %s205, %s206
      %p218 = scmp.eq.s32.totalorder %s44, 1
      %p219 = por %p217, %p218
      %p221 = scmp.ne.s32.totalorder %s206, %s220
      %p222 = scmp.eq.s32.totalorder %s44, 0
      %p223 = por %p221, %p222
      %s225 = sadd.s32 %s224, 1
      %p228 = scmp.eq.s32.totalorder %s38, 1
      %p229 = scmp.ne.s32.totalorder %s224, %s226
      %p230 = scmp.eq.s32.totalorder %s38, 0
      %p231 = por %p229, %p230
      %p232 = scmp.ne.s32.totalorder %s224, %s226
      %p233 = scmp.eq.s32.totalorder %s43, 1
      %p234 = por %p232, %p233
      %p235 = scmp.ne.s32.totalorder %s226, %s227
      %p236 = scmp.eq.s32.totalorder %s43, 0
      %p237 = por %p235, %p236
      %p238 = scmp.ne.s32.totalorder %s226, %s227
      %p239 = scmp.eq.s32.totalorder %s44, 1
      %p240 = por %p238, %p239
      %p242 = scmp.ne.s32.totalorder %s227, %s241
      %p243 = scmp.eq.s32.totalorder %s44, 0
      %p244 = por %p242, %p243
      %s246 = sadd.s32 %s245, 1
      %p249 = scmp.eq.s32.totalorder %s38, 1
      %p250 = scmp.ne.s32.totalorder %s245, %s247
      %p251 = scmp.eq.s32.totalorder %s38, 0
      %p252 = por %p250, %p251
      %p253 = scmp.ne.s32.totalorder %s245, %s247
      %p254 = scmp.eq.s32.totalorder %s43, 1
      %p255 = por %p253, %p254
      %p256 = scmp.ne.s32.totalorder %s247, %s248
      %p257 = scmp.eq.s32.totalorder %s43, 0
      %p258 = por %p256, %p257
      %p259 = scmp.ne.s32.totalorder %s247, %s248
      %p260 = scmp.eq.s32.totalorder %s44, 1
      %p261 = por %p259, %p260
      %p263 = scmp.ne.s32.totalorder %s248, %s262
      %p264 = scmp.eq.s32.totalorder %s44, 0
      %p265 = por %p263, %p264
      %s267 = sadd.s32 %s266, 1
      %p270 = scmp.eq.s32.totalorder %s38, 1
      %p271 = scmp.ne.s32.totalorder %s266, %s268
      %p272 = scmp.eq.s32.totalorder %s38, 0
      %p273 = por %p271, %p272
      %p274 = scmp.ne.s32.totalorder %s266, %s268
      %p275 = scmp.eq.s32.totalorder %s43, 1
      %p276 = por %p274, %p275
      %p277 = scmp.ne.s32.totalorder %s268, %s269
      %p278 = scmp.eq.s32.totalorder %s43, 0
      %p279 = por %p277, %p278
      %p280 = scmp.ne.s32.totalorder %s268, %s269
      %p281 = scmp.eq.s32.totalorder %s44, 1
      %p282 = por %p280, %p281
      %p284 = scmp.ne.s32.totalorder %s269, %s283
      %p285 = scmp.eq.s32.totalorder %s44, 0
      %p286 = por %p284, %p285
      %s288 = sadd.s32 %s287, 1
      %p291 = scmp.eq.s32.totalorder %s38, 1
      %p292 = scmp.ne.s32.totalorder %s287, %s289
      %p293 = scmp.eq.s32.totalorder %s38, 0
      %p294 = por %p292, %p293
      %p295 = scmp.ne.s32.totalorder %s287, %s289
      %p296 = scmp.eq.s32.totalorder %s43, 1
      %p297 = por %p295, %p296
      %p298 = scmp.ne.s32.totalorder %s289, %s290
      %p299 = scmp.eq.s32.totalorder %s43, 0
      %p300 = por %p298, %p299
      %p301 = scmp.ne.s32.totalorder %s289, %s290
      %p302 = scmp.eq.s32.totalorder %s44, 1
      %p303 = por %p301, %p302
      %p305 = scmp.ne.s32.totalorder %s290, %s304
      %p306 = scmp.eq.s32.totalorder %s44, 0
      %p307 = por %p305, %p306
      %s309 = sadd.s32 %s308, 1
      %p312 = scmp.eq.s32.totalorder %s38, 1
      %p313 = scmp.ne.s32.totalorder %s308, %s310
      %p314 = scmp.eq.s32.totalorder %s38, 0
      %p315 = por %p313, %p314
      %p316 = scmp.ne.s32.totalorder %s308, %s310
      %p317 = scmp.eq.s32.totalorder %s43, 1
      %p318 = por %p316, %p317
      %p319 = scmp.ne.s32.totalorder %s310, %s311
      %p320 = scmp.eq.s32.totalorder %s43, 0
      %p321 = por %p319, %p320
      %p322 = scmp.ne.s32.totalorder %s310, %s311
      %p323 = scmp.eq.s32.totalorder %s44, 1
      %p324 = por %p322, %p323
      %p326 = scmp.ne.s32.totalorder %s311, %s325
      %p327 = scmp.eq.s32.totalorder %s44, 0
      %p328 = por %p326, %p327
      %s330 = sadd.s32 %s329, 1
      %p333 = scmp.eq.s32.totalorder %s38, 1
      %p334 = scmp.ne.s32.totalorder %s329, %s331
      %p335 = scmp.eq.s32.totalorder %s38, 0
      %p336 = por %p334, %p335
      %p337 = scmp.ne.s32.totalorder %s329, %s331
      %p338 = scmp.eq.s32.totalorder %s43, 1
      %p339 = por %p337, %p338
      %p340 = scmp.ne.s32.totalorder %s331, %s332
      %p341 = scmp.eq.s32.totalorder %s43, 0
      %p342 = por %p340, %p341
      %p343 = scmp.ne.s32.totalorder %s331, %s332
      %p344 = scmp.eq.s32.totalorder %s44, 1
      %p345 = por %p343, %p344
      %p347 = scmp.ne.s32.totalorder %s332, %s346
      %p348 = scmp.eq.s32.totalorder %s44, 0
      %p349 = por %p347, %p348
      %s351 = sadd.s32 %s350, 1
      %p354 = scmp.eq.s32.totalorder %s38, 1
      %p355 = scmp.ne.s32.totalorder %s350, %s352
      %p356 = scmp.eq.s32.totalorder %s38, 0
      %p357 = por %p355, %p356
      %p358 = scmp.ne.s32.totalorder %s350, %s352
      %p359 = scmp.eq.s32.totalorder %s43, 1
      %p360 = por %p358, %p359
      %p361 = scmp.ne.s32.totalorder %s352, %s353
      %p362 = scmp.eq.s32.totalorder %s43, 0
      %p363 = por %p361, %p362
      %p364 = scmp.ne.s32.totalorder %s352, %s353
      %p365 = scmp.eq.s32.totalorder %s44, 1
      %p366 = por %p364, %p365
      %p368 = scmp.ne.s32.totalorder %s353, %s367
      %p369 = scmp.eq.s32.totalorder %s44, 0
      %p370 = por %p368, %p369
      %s372 = sadd.s32 %s371, 1
      %p375 = scmp.eq.s32.totalorder %s38, 1
      %p376 = scmp.ne.s32.totalorder %s371, %s373
      %p377 = scmp.eq.s32.totalorder %s38, 0
      %p378 = por %p376, %p377
      %p379 = scmp.ne.s32.totalorder %s371, %s373
      %p380 = scmp.eq.s32.totalorder %s43, 1
      %p381 = por %p379, %p380
      %p382 = scmp.ne.s32.totalorder %s373, %s374
      %p383 = scmp.eq.s32.totalorder %s43, 0
      %p384 = por %p382, %p383
      %p385 = scmp.ne.s32.totalorder %s373, %s374
      %p386 = scmp.eq.s32.totalorder %s44, 1
      %p387 = por %p385, %p386
      %p389 = scmp.ne.s32.totalorder %s374, %s388
      %p390 = scmp.eq.s32.totalorder %s44, 0
      %p391 = por %p389, %p390
      %s393 = sadd.s32 %s392, 1
      %p396 = scmp.eq.s32.totalorder %s38, 1
      %p397 = scmp.ne.s32.totalorder %s392, %s394
      %p398 = scmp.eq.s32.totalorder %s38, 0
      %p399 = por %p397, %p398
      %p400 = scmp.ne.s32.totalorder %s392, %s394
      %p401 = scmp.eq.s32.totalorder %s43, 1
      %p402 = por %p400, %p401
      %p403 = scmp.ne.s32.totalorder %s394, %s395
      %p404 = scmp.eq.s32.totalorder %s43, 0
      %p405 = por %p403, %p404
      %p406 = scmp.ne.s32.totalorder %s394, %s395
      %p407 = scmp.eq.s32.totalorder %s44, 1
      %p408 = por %p406, %p407
      %p410 = scmp.ne.s32.totalorder %s395, %s409
      %p411 = scmp.eq.s32.totalorder %s44, 0
      %p412 = por %p410, %p411
      %s414 = sadd.s32 %s413, 1
      %p417 = scmp.eq.s32.totalorder %s38, 1
      %p418 = scmp.ne.s32.totalorder %s413, %s415
      %p419 = scmp.eq.s32.totalorder %s38, 0
      %p420 = por %p418, %p419
      %p421 = scmp.ne.s32.totalorder %s413, %s415
      %p422 = scmp.eq.s32.totalorder %s43, 1
      %p423 = por %p421, %p422
      %p424 = scmp.ne.s32.totalorder %s415, %s416
      %p425 = scmp.eq.s32.totalorder %s43, 0
      %p426 = por %p424, %p425
      %p427 = scmp.ne.s32.totalorder %s415, %s416
      %p428 = scmp.eq.s32.totalorder %s44, 1
      %p429 = por %p427, %p428
      %p431 = scmp.ne.s32.totalorder %s416, %s430
      %p432 = scmp.eq.s32.totalorder %s44, 0
      %p433 = por %p431, %p432
      %s435 = sadd.s32 %s434, 1
      %p438 = scmp.eq.s32.totalorder %s38, 1
      %p439 = scmp.ne.s32.totalorder %s434, %s436
      %p440 = scmp.eq.s32.totalorder %s38, 0
      %p441 = por %p439, %p440
      %p442 = scmp.ne.s32.totalorder %s434, %s436
      %p443 = scmp.eq.s32.totalorder %s43, 1
      %p444 = por %p442, %p443
      %p445 = scmp.ne.s32.totalorder %s436, %s437
      %p446 = scmp.eq.s32.totalorder %s43, 0
      %p447 = por %p445, %p446
      %p448 = scmp.ne.s32.totalorder %s436, %s437
      %p449 = scmp.eq.s32.totalorder %s44, 1
      %p450 = por %p448, %p449
      %p452 = scmp.ne.s32.totalorder %s437, %s451
      %p453 = scmp.eq.s32.totalorder %s44, 0
      %p454 = por %p452, %p453
      %s456 = sadd.s32 %s455, 1
      %p459 = scmp.eq.s32.totalorder %s38, 1
      %p460 = scmp.ne.s32.totalorder %s455, %s457
      %p461 = scmp.eq.s32.totalorder %s38, 0
      %p462 = por %p460, %p461
      %p463 = scmp.ne.s32.totalorder %s455, %s457
      %p464 = scmp.eq.s32.totalorder %s43, 1
      %p465 = por %p463, %p464
      %p466 = scmp.ne.s32.totalorder %s457, %s458
      %p467 = scmp.eq.s32.totalorder %s43, 0
      %p468 = por %p466, %p467
      %p469 = scmp.ne.s32.totalorder %s457, %s458
      %p470 = scmp.eq.s32.totalorder %s44, 1
      %p471 = por %p469, %p470
      %p473 = scmp.ne.s32.totalorder %s458, %s472
      %p474 = scmp.eq.s32.totalorder %s44, 0
      %p475 = por %p473, %p474
      %s477 = sadd.s32 %s476, 1
      %p480 = scmp.eq.s32.totalorder %s38, 1
      %p481 = scmp.ne.s32.totalorder %s476, %s478
      %p482 = scmp.eq.s32.totalorder %s38, 0
      %p483 = por %p481, %p482
      %p484 = scmp.ne.s32.totalorder %s476, %s478
      %p485 = scmp.eq.s32.totalorder %s43, 1
      %p486 = por %p484, %p485
      %p487 = scmp.ne.s32.totalorder %s478, %s479
      %p488 = scmp.eq.s32.totalorder %s43, 0
      %p489 = por %p487, %p488
      %p490 = scmp.ne.s32.totalorder %s478, %s479
      %p491 = scmp.eq.s32.totalorder %s44, 1
      %p492 = por %p490, %p491
      %p494 = scmp.ne.s32.totalorder %s479, %s493
      %p495 = scmp.eq.s32.totalorder %s44, 0
      %p496 = por %p494, %p495
      %s498 = sadd.s32 %s497, 1
      %p501 = scmp.eq.s32.totalorder %s38, 1
      %p502 = scmp.ne.s32.totalorder %s497, %s499
      %p503 = scmp.eq.s32.totalorder %s38, 0
      %p504 = por %p502, %p503
      %p505 = scmp.ne.s32.totalorder %s497, %s499
      %p506 = scmp.eq.s32.totalorder %s43, 1
      %p507 = por %p505, %p506
      %p508 = scmp.ne.s32.totalorder %s499, %s500
      %p509 = scmp.eq.s32.totalorder %s43, 0
      %p510 = por %p508, %p509
      %p511 = scmp.ne.s32.totalorder %s499, %s500
      %p512 = scmp.eq.s32.totalorder %s44, 1
      %p513 = por %p511, %p512
      %p515 = scmp.ne.s32.totalorder %s500, %s514
      %p516 = scmp.eq.s32.totalorder %s44, 0
      %p517 = por %p515, %p516
      %s519 = sadd.s32 %s518, 1
      %p522 = scmp.eq.s32.totalorder %s38, 1
      %p523 = scmp.ne.s32.totalorder %s518, %s520
      %p524 = scmp.eq.s32.totalorder %s38, 0
      %p525 = por %p523, %p524
      %p526 = scmp.ne.s32.totalorder %s518, %s520
      %p527 = scmp.eq.s32.totalorder %s43, 1
      %p528 = por %p526, %p527
      %p529 = scmp.ne.s32.totalorder %s520, %s521
      %p530 = scmp.eq.s32.totalorder %s43, 0
      %p531 = por %p529, %p530
      %p532 = scmp.ne.s32.totalorder %s520, %s521
      %p533 = scmp.eq.s32.totalorder %s44, 1
      %p534 = por %p532, %p533
      %p536 = scmp.ne.s32.totalorder %s521, %s535
      %p537 = scmp.eq.s32.totalorder %s44, 0
      %p538 = por %p536, %p537
      %s540 = sadd.s32 %s539, 1
      %p543 = scmp.eq.s32.totalorder %s38, 1
      %p544 = scmp.ne.s32.totalorder %s539, %s541
      %p545 = scmp.eq.s32.totalorder %s38, 0
      %p546 = por %p544, %p545
      %p547 = scmp.ne.s32.totalorder %s539, %s541
      %p548 = scmp.eq.s32.totalorder %s43, 1
      %p549 = por %p547, %p548
      %p550 = scmp.ne.s32.totalorder %s541, %s542
      %p551 = scmp.eq.s32.totalorder %s43, 0
      %p552 = por %p550, %p551
      %p553 = scmp.ne.s32.totalorder %s541, %s542
      %p554 = scmp.eq.s32.totalorder %s44, 1
      %p555 = por %p553, %p554
      %p557 = scmp.ne.s32.totalorder %s542, %s556
      %p558 = scmp.eq.s32.totalorder %s44, 0
      %p559 = por %p557, %p558
      %s561 = sadd.s32 %s560, 1
      %p564 = scmp.eq.s32.totalorder %s38, 1
      %p565 = scmp.ne.s32.totalorder %s560, %s562
      %p566 = scmp.eq.s32.totalorder %s38, 0
      %p567 = por %p565, %p566
      %p568 = scmp.ne.s32.totalorder %s560, %s562
      %p569 = scmp.eq.s32.totalorder %s43, 1
      %p570 = por %p568, %p569
      %p571 = scmp.ne.s32.totalorder %s562, %s563
      %p572 = scmp.eq.s32.totalorder %s43, 0
      %p573 = por %p571, %p572
      %p574 = scmp.ne.s32.totalorder %s562, %s563
      %p575 = scmp.eq.s32.totalorder %s44, 1
      %p576 = por %p574, %p575
      %p578 = scmp.ne.s32.totalorder %s563, %s577
      %p579 = scmp.eq.s32.totalorder %s44, 0
      %p580 = por %p578, %p579
      %s582 = sadd.s32 %s581, 1
      %p585 = scmp.eq.s32.totalorder %s38, 1
      %p586 = scmp.ne.s32.totalorder %s581, %s583
      %p587 = scmp.eq.s32.totalorder %s38, 0
      %p588 = por %p586, %p587
      %p589 = scmp.ne.s32.totalorder %s581, %s583
      %p590 = scmp.eq.s32.totalorder %s43, 1
      %p591 = por %p589, %p590
      %p592 = scmp.ne.s32.totalorder %s583, %s584
      %p593 = scmp.eq.s32.totalorder %s43, 0
      %p594 = por %p592, %p593
      %p595 = scmp.ne.s32.totalorder %s583, %s584
      %p596 = scmp.eq.s32.totalorder %s44, 1
      %p597 = por %p595, %p596
      %p599 = scmp.ne.s32.totalorder %s584, %s598
      %p600 = scmp.eq.s32.totalorder %s44, 0
      %p601 = por %p599, %p600
      %p602 = scmp.le.s32.totalorder 1, %s38
      %p603 = scmp.lt.s32.totalorder %s38, 3
      %p604 = pnand %p602, %p603
      %p605 = pneg %p604
      // Predicated region
      $region9: #{tpu_custom_call.1} parent=5 // pred_check
        _
      $region10: #{tpu_custom_call.1} parent=5 // pred_check_branch
        %607 = sbr.rel (%p604) target = $region12
      $region11: #{tpu_custom_call.1} parent=5 // pred_region
        %s608 = ssub.s32 %s38, 1
        // Predicated region
        $region13: #{tpu_custom_call.1} parent=11 // pred_check
          %p609 = pneg %p111
        $region14: #{tpu_custom_call.1} parent=11 // pred_check_branch
          %611 = sbr.rel (%p609) target = $region16
        $region15: #{tpu_custom_call.1} parent=11 // pred_region
          %s613 = ssub.s32 128, 128
          %614 = vsyncadd [#allocation6], %s613
          %s616 = sshll.u32 [#allocation5], 4
          %s617 = int_to_ptr.vmem [resolvable:$true] %s616
          %619 = dma.hbm_to_vmem [thread:$0]  %s2, 128, %s617, [#allocation6]
        $region16: #{tpu_custom_call.1} parent=11 // pred_fallthru
          _
        // Predicated region
        $region17: #{tpu_custom_call.1} parent=11 // pred_check
          %p620 = pneg %p132
        $region18: #{tpu_custom_call.1} parent=11 // pred_check_branch
          %622 = sbr.rel (%p620) target = $region20
        $region19: #{tpu_custom_call.1} parent=11 // pred_region
          _
        $region20: #{tpu_custom_call.1} parent=11 // pred_fallthru
          _
        // Predicated region
        $region21: #{tpu_custom_call.1} parent=11 // pred_check
          %p623 = pneg %p153
        $region22: #{tpu_custom_call.1} parent=11 // pred_check_branch
          %625 = sbr.rel (%p623) target = $region24
        $region23: #{tpu_custom_call.1} parent=11 // pred_region
          _
        $region24: #{tpu_custom_call.1} parent=11 // pred_fallthru
          _
        // Predicated region
        $region25: #{tpu_custom_call.1} parent=11 // pred_check
          %p626 = pneg %p174
        $region26: #{tpu_custom_call.1} parent=11 // pred_check_branch
          %628 = sbr.rel (%p626) target = $region28
        $region27: #{tpu_custom_call.1} parent=11 // pred_region
          _
        $region28: #{tpu_custom_call.1} parent=11 // pred_fallthru
          _
        // Predicated region
        $region29: #{tpu_custom_call.1} parent=11 // pred_check
          %p629 = pneg %p195
        $region30: #{tpu_custom_call.1} parent=11 // pred_check_branch
          %631 = sbr.rel (%p629) target = $region32
        $region31: #{tpu_custom_call.1} parent=11 // pred_region
          _
        $region32: #{tpu_custom_call.1} parent=11 // pred_fallthru
          _
        // Predicated region
        $region33: #{tpu_custom_call.1} parent=11 // pred_check
          %p632 = pneg %p216
        $region34: #{tpu_custom_call.1} parent=11 // pred_check_branch
          %634 = sbr.rel (%p632) target = $region36
        $region35: #{tpu_custom_call.1} parent=11 // pred_region
          _
        $region36: #{tpu_custom_call.1} parent=11 // pred_fallthru
          _
        // Predicated region
        $region37: #{tpu_custom_call.1} parent=11 // pred_check
          %p635 = pneg %p237
        $region38: #{tpu_custom_call.1} parent=11 // pred_check_branch
          %637 = sbr.rel (%p635) target = $region40
        $region39: #{tpu_custom_call.1} parent=11 // pred_region
          %s639 = ssub.s32 16, 16
          %640 = vsyncadd [#allocation9], %s639
          %s642 = sshll.u32 [#allocation8], 4
          %s643 = int_to_ptr.vmem [resolvable:$true] %s642
          %645 = dma.hbm_to_vmem [thread:$0]  %s8, 16, %s643, [#allocation9]
        $region40: #{tpu_custom_call.1} parent=11 // pred_fallthru
          _
        // Predicated region
        $region41: #{tpu_custom_call.1} parent=11 // pred_check
          %p646 = pneg %p258
        $region42: #{tpu_custom_call.1} parent=11 // pred_check_branch
          %648 = sbr.rel (%p646) target = $region44
        $region43: #{tpu_custom_call.1} parent=11 // pred_region
          %s650 = ssub.s32 16, 16
          %651 = vsyncadd [#allocation9], %s650
          %s653 = sshll.u32 [#allocation10], 4
          %s654 = int_to_ptr.vmem [resolvable:$true] %s653
          %656 = dma.hbm_to_vmem [thread:$0]  %s9, 16, %s654, [#allocation9]
        $region44: #{tpu_custom_call.1} parent=11 // pred_fallthru
          _
        // Predicated region
        $region45: #{tpu_custom_call.1} parent=11 // pred_check
          %p657 = pneg %p279
        $region46: #{tpu_custom_call.1} parent=11 // pred_check_branch
          %659 = sbr.rel (%p657) target = $region48
        $region47: #{tpu_custom_call.1} parent=11 // pred_region
          _
        $region48: #{tpu_custom_call.1} parent=11 // pred_fallthru
          _
        // Predicated region
        $region49: #{tpu_custom_call.1} parent=11 // pred_check
          %p660 = pneg %p300
        $region50: #{tpu_custom_call.1} parent=11 // pred_check_branch
          %662 = sbr.rel (%p660) target = $region52
        $region51: #{tpu_custom_call.1} parent=11 // pred_region
          %s664 = ssub.s32 16, 16
          %665 = vsyncadd [#allocation12], %s664
          %s667 = sshll.u32 [#allocation11], 4
          %s668 = int_to_ptr.vmem [resolvable:$true] %s667
          %670 = dma.hbm_to_vmem [thread:$0]  %s11, 16, %s668, [#allocation12]
        $region52: #{tpu_custom_call.1} parent=11 // pred_fallthru
          _
        // Predicated region
        $region53: #{tpu_custom_call.1} parent=11 // pred_check
          %p671 = pneg %p321
        $region54: #{tpu_custom_call.1} parent=11 // pred_check_branch
          %673 = sbr.rel (%p671) target = $region56
        $region55: #{tpu_custom_call.1} parent=11 // pred_region
          _
        $region56: #{tpu_custom_call.1} parent=11 // pred_fallthru
          _
        // Predicated region
        $region57: #{tpu_custom_call.1} parent=11 // pred_check
          %p674 = pneg %p342
        $region58: #{tpu_custom_call.1} parent=11 // pred_check_branch
          %676 = sbr.rel (%p674) target = $region60
        $region59: #{tpu_custom_call.1} parent=11 // pred_region
          _
        $region60: #{tpu_custom_call.1} parent=11 // pred_fallthru
          _
        // Predicated region
        $region61: #{tpu_custom_call.1} parent=11 // pred_check
          %p677 = pneg %p363
        $region62: #{tpu_custom_call.1} parent=11 // pred_check_branch
          %679 = sbr.rel (%p677) target = $region64
        $region63: #{tpu_custom_call.1} parent=11 // pred_region
          _
        $region64: #{tpu_custom_call.1} parent=11 // pred_fallthru
          _
        // Predicated region
        $region65: #{tpu_custom_call.1} parent=11 // pred_check
          %p680 = pneg %p384
        $region66: #{tpu_custom_call.1} parent=11 // pred_check_branch
          %682 = sbr.rel (%p680) target = $region68
        $region67: #{tpu_custom_call.1} parent=11 // pred_region
          _
        $region68: #{tpu_custom_call.1} parent=11 // pred_fallthru
          _
        // Predicated region
        $region69: #{tpu_custom_call.1} parent=11 // pred_check
          %p683 = pneg %p405
        $region70: #{tpu_custom_call.1} parent=11 // pred_check_branch
          %685 = sbr.rel (%p683) target = $region72
        $region71: #{tpu_custom_call.1} parent=11 // pred_region
          _
        $region72: #{tpu_custom_call.1} parent=11 // pred_fallthru
          _
        // Predicated region
        $region73: #{tpu_custom_call.1} parent=11 // pred_check
          %p686 = pneg %p426
        $region74: #{tpu_custom_call.1} parent=11 // pred_check_branch
          %688 = sbr.rel (%p686) target = $region76
        $region75: #{tpu_custom_call.1} parent=11 // pred_region
          _
        $region76: #{tpu_custom_call.1} parent=11 // pred_fallthru
          _
        // Predicated region
        $region77: #{tpu_custom_call.1} parent=11 // pred_check
          %p689 = pneg %p447
        $region78: #{tpu_custom_call.1} parent=11 // pred_check_branch
          %691 = sbr.rel (%p689) target = $region80
        $region79: #{tpu_custom_call.1} parent=11 // pred_region
          _
        $region80: #{tpu_custom_call.1} parent=11 // pred_fallthru
          _
        // Predicated region
        $region81: #{tpu_custom_call.1} parent=11 // pred_check
          %p692 = pneg %p468
        $region82: #{tpu_custom_call.1} parent=11 // pred_check_branch
          %694 = sbr.rel (%p692) target = $region84
        $region83: #{tpu_custom_call.1} parent=11 // pred_region
          _
        $region84: #{tpu_custom_call.1} parent=11 // pred_fallthru
          _
        // Predicated region
        $region85: #{tpu_custom_call.1} parent=11 // pred_check
          %p695 = pneg %p489
        $region86: #{tpu_custom_call.1} parent=11 // pred_check_branch
          %697 = sbr.rel (%p695) target = $region88
        $region87: #{tpu_custom_call.1} parent=11 // pred_region
          _
        $region88: #{tpu_custom_call.1} parent=11 // pred_fallthru
          _
        // Predicated region
        $region89: #{tpu_custom_call.1} parent=11 // pred_check
          %p698 = pneg %p510
        $region90: #{tpu_custom_call.1} parent=11 // pred_check_branch
          %700 = sbr.rel (%p698) target = $region92
        $region91: #{tpu_custom_call.1} parent=11 // pred_region
          _
        $region92: #{tpu_custom_call.1} parent=11 // pred_fallthru
          _
        // Predicated region
        $region93: #{tpu_custom_call.1} parent=11 // pred_check
          %p701 = pneg %p531
        $region94: #{tpu_custom_call.1} parent=11 // pred_check_branch
          %703 = sbr.rel (%p701) target = $region96
        $region95: #{tpu_custom_call.1} parent=11 // pred_region
          _
        $region96: #{tpu_custom_call.1} parent=11 // pred_fallthru
          _
        // Predicated region
        $region97: #{tpu_custom_call.1} parent=11 // pred_check
          %p704 = pneg %p552
        $region98: #{tpu_custom_call.1} parent=11 // pred_check_branch
          %706 = sbr.rel (%p704) target = $region100
        $region99: #{tpu_custom_call.1} parent=11 // pred_region
          _
        $region100: #{tpu_custom_call.1} parent=11 // pred_fallthru
          _
      $region12: #{tpu_custom_call.1} parent=5 // pred_fallthru
        _
      %p707 = scmp.lt.s32.totalorder %s38, 2
      // Predicated region
      $region101: #{tpu_custom_call.1} parent=5 // pred_check
        %p708 = pneg %p707
      $region102: #{tpu_custom_call.1} parent=5 // pred_check_branch
        %710 = sbr.rel (%p708) target = $region104
      $region103: #{tpu_custom_call.1} parent=5 // pred_region
        // Predicated region
        $region105: #{tpu_custom_call.1} parent=103 // pred_check
          %p711 = pneg %p58
        $region106: #{tpu_custom_call.1} parent=103 // pred_check_branch
          %713 = sbr.rel (%p711) target = $region108
        $region107: #{tpu_custom_call.1} parent=103 // pred_region
          %p714 = scmp.lt.s32.totalorder %s38, 1
          %s715 = scalar_select %p714, %s38, 1
          %s716 = smul.addr %s715, 8
          %s717 = scalar_lea.vmem %s0, %s716
        $region108: #{tpu_custom_call.1} parent=103 // pred_fallthru
          _
        // Predicated region
        $region109: #{tpu_custom_call.1} parent=103 // pred_check
          %p718 = pneg %p84
        $region110: #{tpu_custom_call.1} parent=103 // pred_check_branch
          %720 = sbr.rel (%p718) target = $region112
        $region111: #{tpu_custom_call.1} parent=103 // pred_region
          %p721 = scmp.lt.s32.totalorder %s38, 1
          %s722 = scalar_select %p721, %s38, 1
          %s723 = smul.addr %s722, 8
          %s724 = scalar_lea.vmem %s1, %s723
        $region112: #{tpu_custom_call.1} parent=103 // pred_fallthru
          _
      $region104: #{tpu_custom_call.1} parent=5 // pred_fallthru
        _
      %p725 = scmp.le.s32.totalorder 1, %s38
      %p726 = scmp.lt.s32.totalorder %s38, 3
      %p727 = pnand %p725, %p726
      %p728 = pneg %p727
      // Predicated region
      $region113: #{tpu_custom_call.1} parent=5 // pred_check
        _
      $region114: #{tpu_custom_call.1} parent=5 // pred_check_branch
        %730 = sbr.rel (%p727) target = $region116
      $region115: #{tpu_custom_call.1} parent=5 // pred_region
        %s731 = ssub.s32 %s38, 1
        // Predicated region
        $region117: #{tpu_custom_call.1} parent=115 // pred_check
          %p732 = pneg %p111
        $region118: #{tpu_custom_call.1} parent=115 // pred_check_branch
          %734 = sbr.rel (%p732) target = $region120
        $region119: #{tpu_custom_call.1} parent=115 // pred_region
          %735 = dma.done [#allocation6], 128
        $region120: #{tpu_custom_call.1} parent=115 // pred_fallthru
          _
        // Predicated region
        $region121: #{tpu_custom_call.1} parent=115 // pred_check
          %p736 = pneg %p237
        $region122: #{tpu_custom_call.1} parent=115 // pred_check_branch
          %738 = sbr.rel (%p736) target = $region124
        $region123: #{tpu_custom_call.1} parent=115 // pred_region
          %739 = dma.done [#allocation9], 16
        $region124: #{tpu_custom_call.1} parent=115 // pred_fallthru
          _
        // Predicated region
        $region125: #{tpu_custom_call.1} parent=115 // pred_check
          %p740 = pneg %p258
        $region126: #{tpu_custom_call.1} parent=115 // pred_check_branch
          %742 = sbr.rel (%p740) target = $region128
        $region127: #{tpu_custom_call.1} parent=115 // pred_region
          %743 = dma.done [#allocation9], 16
        $region128: #{tpu_custom_call.1} parent=115 // pred_fallthru
          _
        // Predicated region
        $region129: #{tpu_custom_call.1} parent=115 // pred_check
          %p744 = pneg %p300
        $region130: #{tpu_custom_call.1} parent=115 // pred_check_branch
          %746 = sbr.rel (%p744) target = $region132
        $region131: #{tpu_custom_call.1} parent=115 // pred_region
          %747 = dma.done [#allocation12], 16
        $region132: #{tpu_custom_call.1} parent=115 // pred_fallthru
          _
        %p748 = scmp.lt.s32.totalorder %s43, 1
        %s749 = scalar_select %p748, %s43, 1
        %s750 = smul.addr %s749, 8
        %s751 = scalar_lea.vmem %s0, %s750
        %p752 = pneg %p64
        %p753 = pneg %p61
        %p754 = scmp.lt.s32.totalorder %s43, 1
        %s755 = scalar_select %p754, %s43, 1
        %s756 = smul.addr %s755, 8
        %s757 = scalar_lea.vmem %s1, %s756
        %p758 = pneg %p90
        %p759 = pneg %p87
        %p760 = pneg %p111
        %p761 = pneg %p108
        %p762 = pneg %p132
        %p763 = pneg %p129
        %p764 = pneg %p153
        %p765 = pneg %p150
        %p766 = pneg %p174
        %p767 = pneg %p171
        %p768 = pneg %p195
        %p769 = pneg %p192
        %p770 = pneg %p216
        %p771 = pneg %p213
        %p772 = pneg %p237
        %p773 = pneg %p234
        %p774 = pneg %p258
        %p775 = pneg %p255
        %p776 = pneg %p279
        %p777 = pneg %p276
        %p778 = pneg %p300
        %p779 = pneg %p297
        %p780 = pneg %p321
        %p781 = pneg %p318
        %p782 = pneg %p342
        %p783 = pneg %p339
        %p784 = pneg %p363
        %p785 = pneg %p360
        %p786 = pneg %p384
        %p787 = pneg %p381
        %p788 = pneg %p405
        %p789 = pneg %p402
        %p790 = pneg %p426
        %p791 = pneg %p423
        %p792 = pneg %p447
        %p793 = pneg %p444
        %p794 = pneg %p468
        %p795 = pneg %p465
        %p796 = pneg %p489
        %p797 = pneg %p486
        %p798 = pneg %p510
        %p799 = pneg %p507
        %p800 = pneg %p531
        %p801 = pneg %p528
        %p802 = pneg %p552
        %p803 = pneg %p549
        %p804 = pneg %p573
        %p805 = pneg %p570
        %p806 = pneg %p594
        %p807 = pneg %p591
        %p808 = scmp.lt.s32.totalorder %s43, 1
        %s809 = scalar_select %p808, %s43, 1
        %s810 = smul.addr %s809, 8
        %s811 = scalar_lea.vmem %s0, %s810
        %p812 = scmp.lt.s32.totalorder %s43, 1
        %s813 = scalar_select %p812, %s43, 1
        %s814 = smul.addr %s813, 8
        %s815 = scalar_lea.vmem %s1, %s814
        %p817 = scmp.eq.s32.totalorder %s43, 0
        // Predicated region
        $region133: #{tpu_custom_call.1} parent=115 // pred_check
          %p818 = pneg %p817
        $region134: #{tpu_custom_call.1} parent=115 // pred_check_branch
          %820 = sbr.rel (%p818) target = $region136
        $region135: #{tpu_custom_call.1} parent=115 // pred_region
          %vm821 = vcmask 261120
          %822 = vst.msk [vmem:[#allocation2] sm:$0xff] %vm821, 0.0
          %vm823 = vcmask 23552
          %824 = vst.msk [vmem:[#allocation3] sm:$0xff] %vm823, 0.0
        $region136: #{tpu_custom_call.1} parent=115 // pred_fallthru
          _
        %v825 = vld [vmem:[%s811] sm:$0xff]
        %v826 = vld [vmem:[%s815] sm:$0xff]
        %v827 = vld [vmem:[#allocation5] sm:$0xff]
        %v828 = vld [vmem:[%s3] sm:$0xff]
        %v829 = vlaneseq
        %v830 = vand.u32 %v829, 127
        %831 = vset.pattern.permute.xlu0 0
        %832 = vperm.xlu0 %831, %v825
        %v833 = vpop.permute.xlu0 %832
        %vm834 = vcmp.eq.s32.totalorder %v833, %v830
        %v835 = vsel %vm834, 1, 0
        %v836 = vcvt.s32.f32 %v835
        %837 = vset.pattern.permute.xlu0 0
        %838 = vperm.xlu0 %837, %v826
        %v839 = vpop.permute.xlu0 %838
        %vm840 = vcmp.eq.s32.totalorder %v839, %v830
        %v841 = vsel %vm840, 1, 0
        %v842 = vcvt.s32.f32 %v841
        %vm843 = vcmask 64512
        %v845 = vsel %vm843, %v836, 0
        %847 = vmatprep.subr.mxu0 0.0
        %848 = vmatpush1.msra.mxu0 %v828
        %849 = vmatprep.subr.mxu0 0.0
        %850 = vmatpush1.msra.mxu0 0.0
        %851 = vmatprep.subr.mxu0 0.0
        %852 = vmatpush1.msra.mxu0 0.0
        %853 = vmatprep.subr.mxu0 0.0
        %854 = vmatpush1.msra.mxu0 0.0
        %855 = vmatprep.subr.mxu0 0.0
        %856 = vmatpush1.msra.mxu0 0.0
        %857 = vmatprep.subr.mxu0 0.0
        %858 = vmatpush1.msra.mxu0 0.0
        %859 = vmatprep.subr.mxu0 0.0
        %860 = vmatpush1.msra.mxu0 0.0
        %861 = vmatprep.subr.mxu0 0.0
        %862 = vmatpush1.msra.mxu0 0.0
        %863 = vmatprep.subr.mxu0 0.0
        %864 = vmatpush1.msra.mxu0 0.0
        %865 = vmatprep.subr.mxu0 0.0
        %866 = vmatpush1.msra.mxu0 0.0
        %867 = vmatprep.subr.mxu0 0.0
        %868 = vmatpush1.msra.mxu0 0.0
        %869 = vmatprep.subr.mxu0 0.0
        %870 = vmatpush1.msra.mxu0 0.0
        %871 = vmatprep.subr.mxu0 0.0
        %872 = vmatpush1.msra.mxu0 0.0
        %873 = vmatprep.subr.mxu0 0.0
        %874 = vmatpush1.msra.mxu0 0.0
        %875 = vmatprep.subr.mxu0 0.0
        %876 = vmatpush1.msra.mxu0 0.0
        %877 = vmatprep.subr.mxu0 0.0
        %878 = vmatpush1.msra.mxu0 0.0
        %879 = vmatprep.subr.mxu0 0.0
        %880 = vmatpush1.msra.mxu0 0.0
        %881 = vmatprep.subr.mxu0 0.0
        %882 = vmatpush1.msra.mxu0 0.0
        %883 = vmatprep.subr.mxu0 0.0
        %884 = vmatpush1.msra.mxu0 0.0
        %885 = vmatprep.subr.mxu0 0.0
        %886 = vmatpush1.msra.mxu0 0.0
        %887 = vmatprep.subr.mxu0 0.0
        %888 = vmatpush1.msra.mxu0 0.0
        %889 = vmatprep.subr.mxu0 0.0
        %890 = vmatpush1.msra.mxu0 0.0
        %891 = vmatprep.subr.mxu0 0.0
        %892 = vmatpush1.msra.mxu0 0.0
        %893 = vmatprep.subr.mxu0 0.0
        %894 = vmatpush1.msra.mxu0 0.0
        %895 = vmatprep.subr.mxu0 0.0
        %896 = vmatpush1.msra.mxu0 0.0
        %897 = vmatprep.subr.mxu0 0.0
        %898 = vmatpush1.msra.mxu0 0.0
        %899 = vmatprep.subr.mxu0 0.0
        %900 = vmatpush1.msra.mxu0 0.0
        %901 = vmatprep.subr.mxu0 0.0
        %902 = vmatpush1.msra.mxu0 0.0
        %903 = vmatprep.subr.mxu0 0.0
        %904 = vmatpush1.msra.mxu0 0.0
        %905 = vmatprep.subr.mxu0 0.0
        %906 = vmatpush1.msra.mxu0 0.0
        %907 = vmatprep.subr.mxu0 0.0
        %908 = vmatpush1.msra.mxu0 0.0
        %909 = vmatprep.subr.mxu0 0.0
        %910 = vmatpush1.msra.mxu0 0.0
        %911 = vmatprep.mubr.f32.mxu0 0.0
        %912 = vmatmul.mubr.f32.gmra.mrb[0].mxu0 %v845
        %v913 = vpop.f32.mrb[0].mxu0
        %v914 = vadd.f32 0.0, %v913
        %v915 = vpop.f32.mrb[0].mxu0
        %916 = vdwg.mxu0
        %v918 = vsel %vm843, %v842, 0
        %920 = vmatprep.subr.mxu0 0.0
        %921 = vmatpush1.msra.mxu0 %v828
        %922 = vmatprep.subr.mxu0 0.0
        %923 = vmatpush1.msra.mxu0 0.0
        %924 = vmatprep.subr.mxu0 0.0
        %925 = vmatpush1.msra.mxu0 0.0
        %926 = vmatprep.subr.mxu0 0.0
        %927 = vmatpush1.msra.mxu0 0.0
        %928 = vmatprep.subr.mxu0 0.0
        %929 = vmatpush1.msra.mxu0 0.0
        %930 = vmatprep.subr.mxu0 0.0
        %931 = vmatpush1.msra.mxu0 0.0
        %932 = vmatprep.subr.mxu0 0.0
        %933 = vmatpush1.msra.mxu0 0.0
        %934 = vmatprep.subr.mxu0 0.0
        %935 = vmatpush1.msra.mxu0 0.0
        %936 = vmatprep.subr.mxu0 0.0
        %937 = vmatpush1.msra.mxu0 0.0
        %938 = vmatprep.subr.mxu0 0.0
        %939 = vmatpush1.msra.mxu0 0.0
        %940 = vmatprep.subr.mxu0 0.0
        %941 = vmatpush1.msra.mxu0 0.0
        %942 = vmatprep.subr.mxu0 0.0
        %943 = vmatpush1.msra.mxu0 0.0
        %944 = vmatprep.subr.mxu0 0.0
        %945 = vmatpush1.msra.mxu0 0.0
        %946 = vmatprep.subr.mxu0 0.0
        %947 = vmatpush1.msra.mxu0 0.0
        %948 = vmatprep.subr.mxu0 0.0
        %949 = vmatpush1.msra.mxu0 0.0
        %950 = vmatprep.subr.mxu0 0.0
        %951 = vmatpush1.msra.mxu0 0.0
        %952 = vmatprep.subr.mxu0 0.0
        %953 = vmatpush1.msra.mxu0 0.0
        %954 = vmatprep.subr.mxu0 0.0
        %955 = vmatpush1.msra.mxu0 0.0
        %956 = vmatprep.subr.mxu0 0.0
        %957 = vmatpush1.msra.mxu0 0.0
        %958 = vmatprep.subr.mxu0 0.0
        %959 = vmatpush1.msra.mxu0 0.0
        %960 = vmatprep.subr.mxu0 0.0
        %961 = vmatpush1.msra.mxu0 0.0
        %962 = vmatprep.subr.mxu0 0.0
        %963 = vmatpush1.msra.mxu0 0.0
        %964 = vmatprep.subr.mxu0 0.0
        %965 = vmatpush1.msra.mxu0 0.0
        %966 = vmatprep.subr.mxu0 0.0
        %967 = vmatpush1.msra.mxu0 0.0
        %968 = vmatprep.subr.mxu0 0.0
        %969 = vmatpush1.msra.mxu0 0.0
        %970 = vmatprep.subr.mxu0 0.0
        %971 = vmatpush1.msra.mxu0 0.0
        %972 = vmatprep.subr.mxu0 0.0
        %973 = vmatpush1.msra.mxu0 0.0
        %974 = vmatprep.subr.mxu0 0.0
        %975 = vmatpush1.msra.mxu0 0.0
        %976 = vmatprep.subr.mxu0 0.0
        %977 = vmatpush1.msra.mxu0 0.0
        %978 = vmatprep.subr.mxu0 0.0
        %979 = vmatpush1.msra.mxu0 0.0
        %980 = vmatprep.subr.mxu0 0.0
        %981 = vmatpush1.msra.mxu0 0.0
        %982 = vmatprep.subr.mxu0 0.0
        %983 = vmatpush1.msra.mxu0 0.0
        %984 = vmatprep.mubr.f32.mxu0 0.0
        %985 = vmatmul.mubr.f32.gmra.mrb[0].mxu0 %v918
        %v986 = vpop.f32.mrb[0].mxu0
        %v987 = vadd.f32 0.0, %v986
        %v988 = vpop.f32.mrb[0].mxu0
        %989 = vdwg.mxu0
        %v990 = vsub.f32 %v914, %v987
        %v991 = vmul.f32 %v990, %v990
        %vm992 = vcmask 23552
        %v993 = vsel %vm992, %v991, 0.0
        %994 = vadd.xlane.f32.xlu0 %v993
        %v995 = vpop.xlane.xlu0 %994
        %996 = vmatprep.subr.mxu0 0.0
        %997 = vmatpush1.msra.mxu0 %v827
        %998 = vmatprep.subr.mxu0 0.0
        %999 = vmatpush1.msra.mxu0 0.0
        %1000 = vmatprep.subr.mxu0 0.0
        %1001 = vmatpush1.msra.mxu0 0.0
        %1002 = vmatprep.subr.mxu0 0.0
        %1003 = vmatpush1.msra.mxu0 0.0
        %1004 = vmatprep.subr.mxu0 0.0
        %1005 = vmatpush1.msra.mxu0 0.0
        %1006 = vmatprep.subr.mxu0 0.0
        %1007 = vmatpush1.msra.mxu0 0.0
        %1008 = vmatprep.subr.mxu0 0.0
        %1009 = vmatpush1.msra.mxu0 0.0
        %1010 = vmatprep.subr.mxu0 0.0
        %1011 = vmatpush1.msra.mxu0 0.0
        %1012 = vmatprep.subr.mxu0 0.0
        %1013 = vmatpush1.msra.mxu0 0.0
        %1014 = vmatprep.subr.mxu0 0.0
        %1015 = vmatpush1.msra.mxu0 0.0
        %1016 = vmatprep.subr.mxu0 0.0
        %1017 = vmatpush1.msra.mxu0 0.0
        %1018 = vmatprep.subr.mxu0 0.0
        %1019 = vmatpush1.msra.mxu0 0.0
        %1020 = vmatprep.subr.mxu0 0.0
        %1021 = vmatpush1.msra.mxu0 0.0
        %1022 = vmatprep.subr.mxu0 0.0
        %1023 = vmatpush1.msra.mxu0 0.0
        %1024 = vmatprep.subr.mxu0 0.0
        %1025 = vmatpush1.msra.mxu0 0.0
        %1026 = vmatprep.subr.mxu0 0.0
        %1027 = vmatpush1.msra.mxu0 0.0
        %1028 = vmatprep.subr.mxu0 0.0
        %1029 = vmatpush1.msra.mxu0 0.0
        %1030 = vmatprep.subr.mxu0 0.0
        %1031 = vmatpush1.msra.mxu0 0.0
        %1032 = vmatprep.subr.mxu0 0.0
        %1033 = vmatpush1.msra.mxu0 0.0
        %1034 = vmatprep.subr.mxu0 0.0
        %1035 = vmatpush1.msra.mxu0 0.0
        %1036 = vmatprep.subr.mxu0 0.0
        %1037 = vmatpush1.msra.mxu0 0.0
        %1038 = vmatprep.subr.mxu0 0.0
        %1039 = vmatpush1.msra.mxu0 0.0
        %1040 = vmatprep.subr.mxu0 0.0
        %1041 = vmatpush1.msra.mxu0 0.0
        %1042 = vmatprep.subr.mxu0 0.0
        %1043 = vmatpush1.msra.mxu0 0.0
        %1044 = vmatprep.subr.mxu0 0.0
        %1045 = vmatpush1.msra.mxu0 0.0
        %1046 = vmatprep.subr.mxu0 0.0
        %1047 = vmatpush1.msra.mxu0 0.0
        %1048 = vmatprep.subr.mxu0 0.0
        %1049 = vmatpush1.msra.mxu0 0.0
        %1050 = vmatprep.subr.mxu0 0.0
        %1051 = vmatpush1.msra.mxu0 0.0
        %1052 = vmatprep.subr.mxu0 0.0
        %1053 = vmatpush1.msra.mxu0 0.0
        %1054 = vmatprep.subr.mxu0 0.0
        %1055 = vmatpush1.msra.mxu0 0.0
        %1056 = vmatprep.subr.mxu0 0.0
        %1057 = vmatpush1.msra.mxu0 0.0
        %1058 = vmatprep.subr.mxu0 0.0
        %1059 = vmatpush1.msra.mxu0 0.0
        %1060 = vmatprep.mubr.f32.mxu0 0.0
        %1061 = vmatmul.mubr.f32.gmra.mrb[0].mxu0 %v845
        %v1062 = vpop.f32.mrb[0].mxu0
        %v1063 = vadd.f32 0.0, %v1062
        %v1064 = vpop.f32.mrb[0].mxu0
        %1065 = vdwg.mxu0
        %1066 = vmatprep.subr.mxu0 0.0
        %1067 = vmatpush1.msra.mxu0 %v827
        %1068 = vmatprep.subr.mxu0 0.0
        %1069 = vmatpush1.msra.mxu0 0.0
        %1070 = vmatprep.subr.mxu0 0.0
        %1071 = vmatpush1.msra.mxu0 0.0
        %1072 = vmatprep.subr.mxu0 0.0
        %1073 = vmatpush1.msra.mxu0 0.0
        %1074 = vmatprep.subr.mxu0 0.0
        %1075 = vmatpush1.msra.mxu0 0.0
        %1076 = vmatprep.subr.mxu0 0.0
        %1077 = vmatpush1.msra.mxu0 0.0
        %1078 = vmatprep.subr.mxu0 0.0
        %1079 = vmatpush1.msra.mxu0 0.0
        %1080 = vmatprep.subr.mxu0 0.0
        %1081 = vmatpush1.msra.mxu0 0.0
        %1082 = vmatprep.subr.mxu0 0.0
        %1083 = vmatpush1.msra.mxu0 0.0
        %1084 = vmatprep.subr.mxu0 0.0
        %1085 = vmatpush1.msra.mxu0 0.0
        %1086 = vmatprep.subr.mxu0 0.0
        %1087 = vmatpush1.msra.mxu0 0.0
        %1088 = vmatprep.subr.mxu0 0.0
        %1089 = vmatpush1.msra.mxu0 0.0
        %1090 = vmatprep.subr.mxu0 0.0
        %1091 = vmatpush1.msra.mxu0 0.0
        %1092 = vmatprep.subr.mxu0 0.0
        %1093 = vmatpush1.msra.mxu0 0.0
        %1094 = vmatprep.subr.mxu0 0.0
        %1095 = vmatpush1.msra.mxu0 0.0
        %1096 = vmatprep.subr.mxu0 0.0
        %1097 = vmatpush1.msra.mxu0 0.0
        %1098 = vmatprep.subr.mxu0 0.0
        %1099 = vmatpush1.msra.mxu0 0.0
        %1100 = vmatprep.subr.mxu0 0.0
        %1101 = vmatpush1.msra.mxu0 0.0
        %1102 = vmatprep.subr.mxu0 0.0
        %1103 = vmatpush1.msra.mxu0 0.0
        %1104 = vmatprep.subr.mxu0 0.0
        %1105 = vmatpush1.msra.mxu0 0.0
        %1106 = vmatprep.subr.mxu0 0.0
        %1107 = vmatpush1.msra.mxu0 0.0
        %1108 = vmatprep.subr.mxu0 0.0
        %1109 = vmatpush1.msra.mxu0 0.0
        %1110 = vmatprep.subr.mxu0 0.0
        %1111 = vmatpush1.msra.mxu0 0.0
        %1112 = vmatprep.subr.mxu0 0.0
        %1113 = vmatpush1.msra.mxu0 0.0
        %1114 = vmatprep.subr.mxu0 0.0
        %1115 = vmatpush1.msra.mxu0 0.0
        %1116 = vmatprep.subr.mxu0 0.0
        %1117 = vmatpush1.msra.mxu0 0.0
        %1118 = vmatprep.subr.mxu0 0.0
        %1119 = vmatpush1.msra.mxu0 0.0
        %1120 = vmatprep.subr.mxu0 0.0
        %1121 = vmatpush1.msra.mxu0 0.0
        %1122 = vmatprep.subr.mxu0 0.0
        %1123 = vmatpush1.msra.mxu0 0.0
        %1124 = vmatprep.subr.mxu0 0.0
        %1125 = vmatpush1.msra.mxu0 0.0
        %1126 = vmatprep.subr.mxu0 0.0
        %1127 = vmatpush1.msra.mxu0 0.0
        %1128 = vmatprep.subr.mxu0 0.0
        %1129 = vmatpush1.msra.mxu0 0.0
        %1130 = vmatprep.mubr.f32.mxu0 0.0
        %1131 = vmatmul.mubr.f32.gmra.mrb[0].mxu0 %v918
        %v1132 = vpop.f32.mrb[0].mxu0
        %v1133 = vadd.f32 0.0, %v1132
        %v1134 = vpop.f32.mrb[0].mxu0
        %1135 = vdwg.mxu0
        %v1136 = vpack.c.bf16 %v1063, %v1063
        %v1137 = vld [vmem:[%s6] sm:$0xf]
        %v1138 = vld [vmem:[%s6 + $0x4] sm:$0xf]
        %v1139 = vld [vmem:[%s6 + $0x8] sm:$0xf]
        %v1140 = vld [vmem:[%s6 + $0xc] sm:$0xf]
        %v1141 = vpack.c.bf16 %v1133, %v1133
        %v1142 = vld [vmem:[%s7] sm:$0xf]
        %v1143 = vld [vmem:[%s7 + $0x4] sm:$0xf]
        %v1144 = vld [vmem:[%s7 + $0x8] sm:$0xf]
        %v1145 = vld [vmem:[%s7 + $0xc] sm:$0xf]
        %v1150 = vunpack.c.l.b16 %v1142
        %v1151 = vunpack.c.l.b16 %v1143
        %v1152 = vunpack.c.l.b16 %v1144
        %v1153 = vunpack.c.l.b16 %v1145
        %v1154 = vpack.c.b16 %v1151, %v1150
        %v1155 = vpack.c.b16 %v1153, %v1152
        %vm1158 = vcmask 261120
        %v1160 = vsel %vm1158, %v1141, 0
        %1162 = vmatprep.subr.bf16.mxu0 0
        %1163 = vmatpush1.bf16.msra.mxu0 %v1154
        %1164 = vmatprep.subr.bf16.mxu0 0
        %1165 = vmatpush1.bf16.msra.mxu0 %v1155
        %1166 = vmatprep.subr.bf16.mxu0 0
        %1167 = vmatpush1.bf16.msra.mxu0 0
        %1168 = vmatprep.subr.bf16.mxu0 0
        %1169 = vmatpush1.bf16.msra.mxu0 0
        %1170 = vmatprep.subr.bf16.mxu0 0
        %1171 = vmatpush1.bf16.msra.mxu0 0
        %1172 = vmatprep.subr.bf16.mxu0 0
        %1173 = vmatpush1.bf16.msra.mxu0 0
        %1174 = vmatprep.subr.bf16.mxu0 0
        %1175 = vmatpush1.bf16.msra.mxu0 0
        %1176 = vmatprep.subr.bf16.mxu0 0
        %1177 = vmatpush1.bf16.msra.mxu0 0
        %1178 = vmatprep.subr.bf16.mxu0 0
        %1179 = vmatpush1.bf16.msra.mxu0 0
        %1180 = vmatprep.subr.bf16.mxu0 0
        %1181 = vmatpush1.bf16.msra.mxu0 0
        %1182 = vmatprep.subr.bf16.mxu0 0
        %1183 = vmatpush1.bf16.msra.mxu0 0
        %1184 = vmatprep.subr.bf16.mxu0 0
        %1185 = vmatpush1.bf16.msra.mxu0 0
        %1186 = vmatprep.subr.bf16.mxu0 0
        %1187 = vmatpush1.bf16.msra.mxu0 0
        %1188 = vmatprep.subr.bf16.mxu0 0
        %1189 = vmatpush1.bf16.msra.mxu0 0
        %1190 = vmatprep.subr.bf16.mxu0 0
        %1191 = vmatpush1.bf16.msra.mxu0 0
        %1192 = vmatprep.subr.bf16.mxu0 0
        %1193 = vmatpush1.bf16.msra.mxu0 0
        %1194 = vmatprep.mubr.bf16.mxu0 0
        %1195 = vmatmul.mubr.bf16.gmra.mrb[0].mxu0 %v1160
        %v1196 = vpop.f32.mrb[0].mxu0
        %v1197 = vadd.f32 0.0, %v1196
        %v1198 = vpop.f32.mrb[0].mxu0
        %v1199 = vpop.f32.mrb[0].mxu0
        %v1200 = vpop.f32.mrb[0].mxu0
        %1201 = vdwg.mxu0
        %v1206 = vunpack.c.l.b16 %v1137
        %v1207 = vunpack.c.l.b16 %v1138
        %v1208 = vunpack.c.l.b16 %v1139
        %v1209 = vunpack.c.l.b16 %v1140
        %v1210 = vpack.c.b16 %v1207, %v1206
        %v1211 = vpack.c.b16 %v1209, %v1208
        %v1215 = vsel %vm1158, %v1136, 0
        %1217 = vmatprep.subr.bf16.mxu0 0
        %1218 = vmatpush1.bf16.msra.mxu0 %v1210
        %1219 = vmatprep.subr.bf16.mxu0 0
        %1220 = vmatpush1.bf16.msra.mxu0 %v1211
        %1221 = vmatprep.subr.bf16.mxu0 0
        %1222 = vmatpush1.bf16.msra.mxu0 0
        %1223 = vmatprep.subr.bf16.mxu0 0
        %1224 = vmatpush1.bf16.msra.mxu0 0
        %1225 = vmatprep.subr.bf16.mxu0 0
        %1226 = vmatpush1.bf16.msra.mxu0 0
        %1227 = vmatprep.subr.bf16.mxu0 0
        %1228 = vmatpush1.bf16.msra.mxu0 0
        %1229 = vmatprep.subr.bf16.mxu0 0
        %1230 = vmatpush1.bf16.msra.mxu0 0
        %1231 = vmatprep.subr.bf16.mxu0 0
        %1232 = vmatpush1.bf16.msra.mxu0 0
        %1233 = vmatprep.subr.bf16.mxu0 0
        %1234 = vmatpush1.bf16.msra.mxu0 0
        %1235 = vmatprep.subr.bf16.mxu0 0
        %1236 = vmatpush1.bf16.msra.mxu0 0
        %1237 = vmatprep.subr.bf16.mxu0 0
        %1238 = vmatpush1.bf16.msra.mxu0 0
        %1239 = vmatprep.subr.bf16.mxu0 0
        %1240 = vmatpush1.bf16.msra.mxu0 0
        %1241 = vmatprep.subr.bf16.mxu0 0
        %1242 = vmatpush1.bf16.msra.mxu0 0
        %1243 = vmatprep.subr.bf16.mxu0 0
        %1244 = vmatpush1.bf16.msra.mxu0 0
        %1245 = vmatprep.subr.bf16.mxu0 0
        %1246 = vmatpush1.bf16.msra.mxu0 0
        %1247 = vmatprep.subr.bf16.mxu0 0
        %1248 = vmatpush1.bf16.msra.mxu0 0
        %1249 = vmatprep.mubr.bf16.mxu0 0
        %1250 = vmatmul.mubr.bf16.gmra.mrb[0].mxu0 %v1215
        %v1251 = vpop.f32.mrb[0].mxu0
        %v1252 = vadd.f32 %v1197, %v1251
        %v1253 = vpop.f32.mrb[0].mxu0
        %v1254 = vpop.f32.mrb[0].mxu0
        %v1255 = vpop.f32.mrb[0].mxu0
        %1256 = vdwg.mxu0
        %v1257 = vld [vmem:[#allocation8] sm:$0x1]
        %v1259 = vlaneseq
        %v1260 = vshrl.u32 %v1259, 7
        %v1261 = vsub.s32 0, %v1260
        %v1262 = vrot.slane %v1257, %v1261
        %v1264 = vmul.f32 %v995, %v1262
        %v1265 = vadd.f32 %v1252, %v1264
        %v1266 = vld [vmem:[#allocation10] sm:$0x1]
        %v1268 = vlaneseq
        %v1269 = vshrl.u32 %v1268, 7
        %v1270 = vsub.s32 0, %v1269
        %v1271 = vrot.slane %v1266, %v1270
        %v1273 = vadd.f32 %v1265, %v1271
        %v1274 = vmax.f32 %v1273, 0.0
        %v1275 = vpack.c.bf16 %v1274, %v1274
        %v1276 = vld [vmem:[%s10] sm:$0xf]
        %v1277 = vld [vmem:[%s10 + $0x4] sm:$0xf]
        %v1278 = vld [vmem:[%s10 + $0x8] sm:$0xf]
        %v1279 = vld [vmem:[%s10 + $0xc] sm:$0xf]
        %v1280 = vld [vmem:[#allocation11] sm:$0x1]
        %v1282 = vlaneseq
        %v1283 = vshrl.u32 %v1282, 7
        %v1284 = vsub.s32 0, %v1283
        %v1285 = vrot.slane %v1280, %v1284
        %v1291 = vunpack.c.l.b16 %v1276
        %v1292 = vunpack.c.l.b16 %v1277
        %v1293 = vunpack.c.l.b16 %v1278
        %v1294 = vunpack.c.l.b16 %v1279
        %v1295 = vpack.c.b16 %v1292, %v1291
        %v1296 = vpack.c.b16 %v1294, %v1293
        %v1300 = vsel %vm1158, %v1275, 0
        %1302 = vmatprep.subr.bf16.mxu0 0
        %1303 = vmatpush1.bf16.msra.mxu0 %v1295
        %1304 = vmatprep.subr.bf16.mxu0 0
        %1305 = vmatpush1.bf16.msra.mxu0 %v1296
        %1306 = vmatprep.subr.bf16.mxu0 0
        %1307 = vmatpush1.bf16.msra.mxu0 0
        %1308 = vmatprep.subr.bf16.mxu0 0
        %1309 = vmatpush1.bf16.msra.mxu0 0
        %1310 = vmatprep.subr.bf16.mxu0 0
        %1311 = vmatpush1.bf16.msra.mxu0 0
        %1312 = vmatprep.subr.bf16.mxu0 0
        %1313 = vmatpush1.bf16.msra.mxu0 0
        %1314 = vmatprep.subr.bf16.mxu0 0
        %1315 = vmatpush1.bf16.msra.mxu0 0
        %1316 = vmatprep.subr.bf16.mxu0 0
        %1317 = vmatpush1.bf16.msra.mxu0 0
        %1318 = vmatprep.subr.bf16.mxu0 0
        %1319 = vmatpush1.bf16.msra.mxu0 0
        %1320 = vmatprep.subr.bf16.mxu0 0
        %1321 = vmatpush1.bf16.msra.mxu0 0
        %1322 = vmatprep.subr.bf16.mxu0 0
        %1323 = vmatpush1.bf16.msra.mxu0 0
        %1324 = vmatprep.subr.bf16.mxu0 0
        %1325 = vmatpush1.bf16.msra.mxu0 0
        %1326 = vmatprep.subr.bf16.mxu0 0
        %1327 = vmatpush1.bf16.msra.mxu0 0
        %1328 = vmatprep.subr.bf16.mxu0 0
        %1329 = vmatpush1.bf16.msra.mxu0 0
        %1330 = vmatprep.subr.bf16.mxu0 0
        %1331 = vmatpush1.bf16.msra.mxu0 0
        %1332 = vmatprep.subr.bf16.mxu0 0
        %1333 = vmatpush1.bf16.msra.mxu0 0
        %1334 = vmatprep.mubr.bf16.mxu0 0
        %1335 = vmatmul.mubr.bf16.gmra.mrb[0].mxu0 %v1300
        %v1336 = vpop.f32.mrb[0].mxu0
        %v1337 = vadd.f32 %v1285, %v1336
        %v1338 = vpop.f32.mrb[0].mxu0
        %v1339 = vpop.f32.mrb[0].mxu0
        %v1340 = vpop.f32.mrb[0].mxu0
        %1341 = vdwg.mxu0
        %v1342 = vmax.f32 %v1337, 0.0
        %v1343 = vpack.c.bf16 %v1342, %v1342
        %v1344 = vld [vmem:[%s12] sm:$0xf]
        %v1345 = vld [vmem:[%s12 + $0x4] sm:$0xf]
        %v1346 = vld [vmem:[%s12 + $0x8] sm:$0xf]
        %v1347 = vld [vmem:[%s12 + $0xc] sm:$0xf]
        %v1348 = vld [vmem:[%s13] sm:$0x1]
        %v1350 = vlaneseq
        %v1351 = vshrl.u32 %v1350, 7
        %v1352 = vsub.s32 0, %v1351
        %v1353 = vrot.slane %v1348, %v1352
        %v1359 = vunpack.c.l.b16 %v1344
        %v1360 = vunpack.c.l.b16 %v1345
        %v1361 = vunpack.c.l.b16 %v1346
        %v1362 = vunpack.c.l.b16 %v1347
        %v1363 = vpack.c.b16 %v1360, %v1359
        %v1364 = vpack.c.b16 %v1362, %v1361
        %v1368 = vsel %vm1158, %v1343, 0
        %1370 = vmatprep.subr.bf16.mxu0 0
        %1371 = vmatpush1.bf16.msra.mxu0 %v1363
        %1372 = vmatprep.subr.bf16.mxu0 0
        %1373 = vmatpush1.bf16.msra.mxu0 %v1364
        %1374 = vmatprep.subr.bf16.mxu0 0
        %1375 = vmatpush1.bf16.msra.mxu0 0
        %1376 = vmatprep.subr.bf16.mxu0 0
        %1377 = vmatpush1.bf16.msra.mxu0 0
        %1378 = vmatprep.subr.bf16.mxu0 0
        %1379 = vmatpush1.bf16.msra.mxu0 0
        %1380 = vmatprep.subr.bf16.mxu0 0
        %1381 = vmatpush1.bf16.msra.mxu0 0
        %1382 = vmatprep.subr.bf16.mxu0 0
        %1383 = vmatpush1.bf16.msra.mxu0 0
        %1384 = vmatprep.subr.bf16.mxu0 0
        %1385 = vmatpush1.bf16.msra.mxu0 0
        %1386 = vmatprep.subr.bf16.mxu0 0
        %1387 = vmatpush1.bf16.msra.mxu0 0
        %1388 = vmatprep.subr.bf16.mxu0 0
        %1389 = vmatpush1.bf16.msra.mxu0 0
        %1390 = vmatprep.subr.bf16.mxu0 0
        %1391 = vmatpush1.bf16.msra.mxu0 0
        %1392 = vmatprep.subr.bf16.mxu0 0
        %1393 = vmatpush1.bf16.msra.mxu0 0
        %1394 = vmatprep.subr.bf16.mxu0 0
        %1395 = vmatpush1.bf16.msra.mxu0 0
        %1396 = vmatprep.subr.bf16.mxu0 0
        %1397 = vmatpush1.bf16.msra.mxu0 0
        %1398 = vmatprep.subr.bf16.mxu0 0
        %1399 = vmatpush1.bf16.msra.mxu0 0
        %1400 = vmatprep.subr.bf16.mxu0 0
        %1401 = vmatpush1.bf16.msra.mxu0 0
        %1402 = vmatprep.mubr.bf16.mxu0 0
        %1403 = vmatmul.mubr.bf16.gmra.mrb[0].mxu0 %v1368
        %v1404 = vpop.f32.mrb[0].mxu0
        %v1405 = vadd.f32 %v1353, %v1404
        %v1406 = vpop.f32.mrb[0].mxu0
        %v1407 = vpop.f32.mrb[0].mxu0
        %v1408 = vpop.f32.mrb[0].mxu0
        %1409 = vdwg.mxu0
        %v1410 = vmax.f32 %v1405, 0.0
        %v1411 = vld [vmem:[%s14] sm:$0x1]
        %v1413 = vlaneseq
        %v1414 = vshrl.u32 %v1413, 7
        %v1415 = vsub.s32 0, %v1414
        %v1416 = vrot.slane %v1411, %v1415
        %v1418 = vmul.f32 %v1410, %v1416
        %v1419 = vsel %vm1158, %v1418, 0.0
        %1420 = vadd.xlane.f32.xlu0 %v1419
        %v1421 = vpop.xlane.xlu0 %1420
        %v1422 = vmul.f32 %v990, %v1421
        %v1423 = vmax.f32 %v1422, -100.0
        %v1424 = vmin.f32 %v1423, 100.0
        %v1425 = vld [vmem:[#allocation2] sm:$0xff]
        %1426 = vxpose.xlu0.b32.start [1/16] %v836, 128
        %1427 = vxpose.xlu0.b32.cont [2/16] 0.0, 128
        %1428 = vxpose.xlu0.b32.cont [3/16] 0.0, 128
        %1429 = vxpose.xlu0.b32.cont [4/16] 0.0, 128
        %1430 = vxpose.xlu0.b32.cont [5/16] 0.0, 128
        %1431 = vxpose.xlu0.b32.cont [6/16] 0.0, 128
        %1432 = vxpose.xlu0.b32.cont [7/16] 0.0, 128
        %1433 = vxpose.xlu0.b32.cont [8/16] 0.0, 128
        %1434 = vxpose.xlu0.b32.cont [9/16] 0.0, 128
        %1435 = vxpose.xlu0.b32.cont [10/16] 0.0, 128
        %1436 = vxpose.xlu0.b32.cont [11/16] 0.0, 128
        %1437 = vxpose.xlu0.b32.cont [12/16] 0.0, 128
        %1438 = vxpose.xlu0.b32.cont [13/16] 0.0, 128
        %1439 = vxpose.xlu0.b32.cont [14/16] 0.0, 128
        %1440 = vxpose.xlu0.b32.cont [15/16] 0.0, 128
        %1441 = vxpose.xlu0.b32.end [16/16] 0.0, 128
        %v1442 = vpop.trf.xlu0
        %v1443 = vpop.trf.xlu0
        %v1444 = vpop.trf.xlu0
        %v1445 = vpop.trf.xlu0
        %v1446 = vpop.trf.xlu0
        %v1447 = vpop.trf.xlu0
        %v1448 = vpop.trf.xlu0
        %v1449 = vpop.trf.xlu0
        %v1450 = vpop.trf.xlu0
        %v1451 = vpop.trf.xlu0
        %v1452 = vpop.trf.xlu0
        %v1453 = vpop.trf.xlu0
        %v1454 = vpop.trf.xlu0
        %v1455 = vpop.trf.xlu0
        %v1456 = vpop.trf.xlu0
        %v1457 = vpop.trf.xlu0
        %v1459 = vsel %vm843, %v1442, 0
        %1461 = vmatprep.subr.mxu0 0.0
        %1462 = vmatpush1.msra.mxu0 %v1342
        %1463 = vmatprep.subr.mxu0 0.0
        %1464 = vmatpush1.msra.mxu0 0.0
        %1465 = vmatprep.subr.mxu0 0.0
        %1466 = vmatpush1.msra.mxu0 0.0
        %1467 = vmatprep.subr.mxu0 0.0
        %1468 = vmatpush1.msra.mxu0 0.0
        %1469 = vmatprep.subr.mxu0 0.0
        %1470 = vmatpush1.msra.mxu0 0.0
        %1471 = vmatprep.subr.mxu0 0.0
        %1472 = vmatpush1.msra.mxu0 0.0
        %1473 = vmatprep.subr.mxu0 0.0
        %1474 = vmatpush1.msra.mxu0 0.0
        %1475 = vmatprep.subr.mxu0 0.0
        %1476 = vmatpush1.msra.mxu0 0.0
        %1477 = vmatprep.subr.mxu0 0.0
        %1478 = vmatpush1.msra.mxu0 0.0
        %1479 = vmatprep.subr.mxu0 0.0
        %1480 = vmatpush1.msra.mxu0 0.0
        %1481 = vmatprep.subr.mxu0 0.0
        %1482 = vmatpush1.msra.mxu0 0.0
        %1483 = vmatprep.subr.mxu0 0.0
        %1484 = vmatpush1.msra.mxu0 0.0
        %1485 = vmatprep.subr.mxu0 0.0
        %1486 = vmatpush1.msra.mxu0 0.0
        %1487 = vmatprep.subr.mxu0 0.0
        %1488 = vmatpush1.msra.mxu0 0.0
        %1489 = vmatprep.subr.mxu0 0.0
        %1490 = vmatpush1.msra.mxu0 0.0
        %1491 = vmatprep.subr.mxu0 0.0
        %1492 = vmatpush1.msra.mxu0 0.0
        %1493 = vmatprep.subr.mxu0 0.0
        %1494 = vmatpush1.msra.mxu0 0.0
        %1495 = vmatprep.subr.mxu0 0.0
        %1496 = vmatpush1.msra.mxu0 0.0
        %1497 = vmatprep.subr.mxu0 0.0
        %1498 = vmatpush1.msra.mxu0 0.0
        %1499 = vmatprep.subr.mxu0 0.0
        %1500 = vmatpush1.msra.mxu0 0.0
        %1501 = vmatprep.subr.mxu0 0.0
        %1502 = vmatpush1.msra.mxu0 0.0
        %1503 = vmatprep.subr.mxu0 0.0
        %1504 = vmatpush1.msra.mxu0 0.0
        %1505 = vmatprep.subr.mxu0 0.0
        %1506 = vmatpush1.msra.mxu0 0.0
        %1507 = vmatprep.subr.mxu0 0.0
        %1508 = vmatpush1.msra.mxu0 0.0
        %1509 = vmatprep.subr.mxu0 0.0
        %1510 = vmatpush1.msra.mxu0 0.0
        %1511 = vmatprep.subr.mxu0 0.0
        %1512 = vmatpush1.msra.mxu0 0.0
        %1513 = vmatprep.subr.mxu0 0.0
        %1514 = vmatpush1.msra.mxu0 0.0
        %1515 = vmatprep.subr.mxu0 0.0
        %1516 = vmatpush1.msra.mxu0 0.0
        %1517 = vmatprep.subr.mxu0 0.0
        %1518 = vmatpush1.msra.mxu0 0.0
        %1519 = vmatprep.subr.mxu0 0.0
        %1520 = vmatpush1.msra.mxu0 0.0
        %1521 = vmatprep.subr.mxu0 0.0
        %1522 = vmatpush1.msra.mxu0 0.0
        %1523 = vmatprep.subr.mxu0 0.0
        %1524 = vmatpush1.msra.mxu0 0.0
        %1525 = vmatprep.mubr.f32.mxu0 0.0
        %1526 = vmatmul.mubr.f32.gmra.mrb[0].mxu0 %v1459
        %v1527 = vpop.f32.mrb[0].mxu0
        %v1528 = vadd.f32 0.0, %v1527
        %v1529 = vpop.f32.mrb[0].mxu0
        %1530 = vdwg.mxu0
        %v1531 = vadd.f32 %v1425, %v1528
        %1532 = vst.msk [vmem:[#allocation2] sm:$0xff] %vm1158, %v1531
        %v1533 = vld [vmem:[#allocation3] sm:$0xff]
        %1534 = vmatprep.subr.mxu0 0.0
        %1535 = vmatpush1.msra.mxu0 %v1424
        %1536 = vmatprep.subr.mxu0 0.0
        %1537 = vmatpush1.msra.mxu0 0.0
        %1538 = vmatprep.subr.mxu0 0.0
        %1539 = vmatpush1.msra.mxu0 0.0
        %1540 = vmatprep.subr.mxu0 0.0
        %1541 = vmatpush1.msra.mxu0 0.0
        %1542 = vmatprep.subr.mxu0 0.0
        %1543 = vmatpush1.msra.mxu0 0.0
        %1544 = vmatprep.subr.mxu0 0.0
        %1545 = vmatpush1.msra.mxu0 0.0
        %1546 = vmatprep.subr.mxu0 0.0
        %1547 = vmatpush1.msra.mxu0 0.0
        %1548 = vmatprep.subr.mxu0 0.0
        %1549 = vmatpush1.msra.mxu0 0.0
        %1550 = vmatprep.subr.mxu0 0.0
        %1551 = vmatpush1.msra.mxu0 0.0
        %1552 = vmatprep.subr.mxu0 0.0
        %1553 = vmatpush1.msra.mxu0 0.0
        %1554 = vmatprep.subr.mxu0 0.0
        %1555 = vmatpush1.msra.mxu0 0.0
        %1556 = vmatprep.subr.mxu0 0.0
        %1557 = vmatpush1.msra.mxu0 0.0
        %1558 = vmatprep.subr.mxu0 0.0
        %1559 = vmatpush1.msra.mxu0 0.0
        %1560 = vmatprep.subr.mxu0 0.0
        %1561 = vmatpush1.msra.mxu0 0.0
        %1562 = vmatprep.subr.mxu0 0.0
        %1563 = vmatpush1.msra.mxu0 0.0
        %1564 = vmatprep.subr.mxu0 0.0
        %1565 = vmatpush1.msra.mxu0 0.0
        %1566 = vmatprep.subr.mxu0 0.0
        %1567 = vmatpush1.msra.mxu0 0.0
        %1568 = vmatprep.subr.mxu0 0.0
        %1569 = vmatpush1.msra.mxu0 0.0
        %1570 = vmatprep.subr.mxu0 0.0
        %1571 = vmatpush1.msra.mxu0 0.0
        %1572 = vmatprep.subr.mxu0 0.0
        %1573 = vmatpush1.msra.mxu0 0.0
        %1574 = vmatprep.subr.mxu0 0.0
        %1575 = vmatpush1.msra.mxu0 0.0
        %1576 = vmatprep.subr.mxu0 0.0
        %1577 = vmatpush1.msra.mxu0 0.0
        %1578 = vmatprep.subr.mxu0 0.0
        %1579 = vmatpush1.msra.mxu0 0.0
        %1580 = vmatprep.subr.mxu0 0.0
        %1581 = vmatpush1.msra.mxu0 0.0
        %1582 = vmatprep.subr.mxu0 0.0
        %1583 = vmatpush1.msra.mxu0 0.0
        %1584 = vmatprep.subr.mxu0 0.0
        %1585 = vmatpush1.msra.mxu0 0.0
        %1586 = vmatprep.subr.mxu0 0.0
        %1587 = vmatpush1.msra.mxu0 0.0
        %1588 = vmatprep.subr.mxu0 0.0
        %1589 = vmatpush1.msra.mxu0 0.0
        %1590 = vmatprep.subr.mxu0 0.0
        %1591 = vmatpush1.msra.mxu0 0.0
        %1592 = vmatprep.subr.mxu0 0.0
        %1593 = vmatpush1.msra.mxu0 0.0
        %1594 = vmatprep.subr.mxu0 0.0
        %1595 = vmatpush1.msra.mxu0 0.0
        %1596 = vmatprep.subr.mxu0 0.0
        %1597 = vmatpush1.msra.mxu0 0.0
        %1598 = vmatprep.mubr.f32.mxu0 0.0
        %1599 = vmatmul.mubr.f32.gmra.mrb[0].mxu0 %v1459
        %v1600 = vpop.f32.mrb[0].mxu0
        %v1601 = vadd.f32 0.0, %v1600
        %v1602 = vpop.f32.mrb[0].mxu0
        %1603 = vdwg.mxu0
        %v1604 = vadd.f32 %v1533, %v1601
        %1605 = vst.msk [vmem:[#allocation3] sm:$0xff] %vm992, %v1604
        %p1606 = scmp.eq.s32.totalorder %s43, 1
        // Predicated region
        $region137: #{tpu_custom_call.1} parent=115 // pred_check
          %p1607 = pneg %p1606
        $region138: #{tpu_custom_call.1} parent=115 // pred_check_branch
          %1609 = sbr.rel (%p1607) target = $region140
        $region139: #{tpu_custom_call.1} parent=115 // pred_region
          %v1610 = vld [vmem:[%s4] sm:$0xff]
          %v1611 = vld [vmem:[%s5] sm:$0xff]
          %v1612 = vmax.f32 %v1611, 1.0
          %v1613 = vrcp.pop %v1612
          %v1614 = vld [vmem:[#allocation3] sm:$0xff]
          %1616 = vset.pattern.permute.xlu0 0
          %1617 = vperm.xlu0 %1616, %v1613
          %v1618 = vpop.permute.xlu0 %1617
          %v1620 = vmul.f32 %v1614, %v1618
          %v1621 = vadd.f32 %v828, %v1620
          %v1622 = vpack.c.bf16 %v827, %v827
          %v1623 = vld [vmem:[%s15] sm:$0xf]
          %v1624 = vld [vmem:[%s15 + $0x4] sm:$0xf]
          %v1625 = vld [vmem:[%s15 + $0x8] sm:$0xf]
          %v1626 = vld [vmem:[%s15 + $0xc] sm:$0xf]
          %v1627 = vld [vmem:[%s16] sm:$0x1]
          %v1629 = vlaneseq
          %v1630 = vshrl.u32 %v1629, 7
          %v1631 = vsub.s32 0, %v1630
          %v1632 = vrot.slane %v1627, %v1631
          %v1638 = vunpack.c.l.b16 %v1623
          %v1639 = vunpack.c.l.b16 %v1624
          %v1640 = vunpack.c.l.b16 %v1625
          %v1641 = vunpack.c.l.b16 %v1626
          %v1642 = vpack.c.b16 %v1639, %v1638
          %v1643 = vpack.c.b16 %v1641, %v1640
          %v1647 = vsel %vm1158, %v1622, 0
          %1649 = vmatprep.subr.bf16.mxu0 0
          %1650 = vmatpush1.bf16.msra.mxu0 %v1642
          %1651 = vmatprep.subr.bf16.mxu0 0
          %1652 = vmatpush1.bf16.msra.mxu0 %v1643
          %1653 = vmatprep.subr.bf16.mxu0 0
          %1654 = vmatpush1.bf16.msra.mxu0 0
          %1655 = vmatprep.subr.bf16.mxu0 0
          %1656 = vmatpush1.bf16.msra.mxu0 0
          %1657 = vmatprep.subr.bf16.mxu0 0
          %1658 = vmatpush1.bf16.msra.mxu0 0
          %1659 = vmatprep.subr.bf16.mxu0 0
          %1660 = vmatpush1.bf16.msra.mxu0 0
          %1661 = vmatprep.subr.bf16.mxu0 0
          %1662 = vmatpush1.bf16.msra.mxu0 0
          %1663 = vmatprep.subr.bf16.mxu0 0
          %1664 = vmatpush1.bf16.msra.mxu0 0
          %1665 = vmatprep.subr.bf16.mxu0 0
          %1666 = vmatpush1.bf16.msra.mxu0 0
          %1667 = vmatprep.subr.bf16.mxu0 0
          %1668 = vmatpush1.bf16.msra.mxu0 0
          %1669 = vmatprep.subr.bf16.mxu0 0
          %1670 = vmatpush1.bf16.msra.mxu0 0
          %1671 = vmatprep.subr.bf16.mxu0 0
          %1672 = vmatpush1.bf16.msra.mxu0 0
          %1673 = vmatprep.subr.bf16.mxu0 0
          %1674 = vmatpush1.bf16.msra.mxu0 0
          %1675 = vmatprep.subr.bf16.mxu0 0
          %1676 = vmatpush1.bf16.msra.mxu0 0
          %1677 = vmatprep.subr.bf16.mxu0 0
          %1678 = vmatpush1.bf16.msra.mxu0 0
          %1679 = vmatprep.subr.bf16.mxu0 0
          %1680 = vmatpush1.bf16.msra.mxu0 0
          %1681 = vmatprep.mubr.bf16.mxu0 0
          %1682 = vmatmul.mubr.bf16.gmra.mrb[0].mxu0 %v1647
          %v1683 = vpop.f32.mrb[0].mxu0
          %v1684 = vadd.f32 %v1632, %v1683
          %v1685 = vpop.f32.mrb[0].mxu0
          %v1686 = vpop.f32.mrb[0].mxu0
          %v1687 = vpop.f32.mrb[0].mxu0
          %1688 = vdwg.mxu0
          %v1689 = vmax.f32 %v1684, 0.0
          %v1690 = vld [vmem:[%s17] sm:$0x1]
          %v1692 = vlaneseq
          %v1693 = vshrl.u32 %v1692, 7
          %v1694 = vsub.s32 0, %v1693
          %v1695 = vrot.slane %v1690, %v1694
          %v1697 = vmul.f32 %v1689, %v1695
          %v1698 = vsel %vm1158, %v1697, 0.0
          %1699 = vadd.xlane.f32.xlu0 %v1698
          %v1700 = vpop.xlane.xlu0 %1699
          %v1701 = vld [vmem:[#allocation4] sm:$0x1]
          %v1703 = vlaneseq
          %v1704 = vshrl.u32 %v1703, 7
          %v1705 = vsub.s32 0, %v1704
          %v1706 = vrot.slane %v1701, %v1705
          %v1708 = vadd.f32 %v1700, %v1706
          %1710 = vset.pattern.permute.xlu0 0
          %1711 = vperm.xlu0 %1710, %v1708
          %v1712 = vpop.permute.xlu0 %1711
          %v1714 = vmul.f32 %v1712, %v1610
          %v1715 = vadd.f32 %v1621, %v1714
          %1716 = vst.msk [vmem:[%s25] sm:$0xff] %vm992, %v1715
          %v1717 = vld [vmem:[%s19] sm:$0xf]
          %v1718 = vld [vmem:[%s19 + $0x4] sm:$0xf]
          %v1719 = vld [vmem:[%s19 + $0x8] sm:$0xf]
          %v1720 = vld [vmem:[%s19 + $0xc] sm:$0xf]
          %v1721 = vld [vmem:[#allocation2] sm:$0xff]
          %v1722 = vpack.c.bf16 %v1721, %v1721
          %v1723 = vld [vmem:[%s20] sm:$0xf]
          %v1724 = vld [vmem:[%s20 + $0x4] sm:$0xf]
          %v1725 = vld [vmem:[%s20 + $0x8] sm:$0xf]
          %v1726 = vld [vmem:[%s20 + $0xc] sm:$0xf]
          %v1731 = vunpack.c.l.b16 %v1723
          %v1732 = vunpack.c.l.b16 %v1724
          %v1733 = vunpack.c.l.b16 %v1725
          %v1734 = vunpack.c.l.b16 %v1726
          %v1735 = vpack.c.b16 %v1732, %v1731
          %v1736 = vpack.c.b16 %v1734, %v1733
          %v1740 = vsel %vm1158, %v1722, 0
          %1742 = vmatprep.subr.bf16.mxu0 0
          %1743 = vmatpush1.bf16.msra.mxu0 %v1735
          %1744 = vmatprep.subr.bf16.mxu0 0
          %1745 = vmatpush1.bf16.msra.mxu0 %v1736
          %1746 = vmatprep.subr.bf16.mxu0 0
          %1747 = vmatpush1.bf16.msra.mxu0 0
          %1748 = vmatprep.subr.bf16.mxu0 0
          %1749 = vmatpush1.bf16.msra.mxu0 0
          %1750 = vmatprep.subr.bf16.mxu0 0
          %1751 = vmatpush1.bf16.msra.mxu0 0
          %1752 = vmatprep.subr.bf16.mxu0 0
          %1753 = vmatpush1.bf16.msra.mxu0 0
          %1754 = vmatprep.subr.bf16.mxu0 0
          %1755 = vmatpush1.bf16.msra.mxu0 0
          %1756 = vmatprep.subr.bf16.mxu0 0
          %1757 = vmatpush1.bf16.msra.mxu0 0
          %1758 = vmatprep.subr.bf16.mxu0 0
          %1759 = vmatpush1.bf16.msra.mxu0 0
          %1760 = vmatprep.subr.bf16.mxu0 0
          %1761 = vmatpush1.bf16.msra.mxu0 0
          %1762 = vmatprep.subr.bf16.mxu0 0
          %1763 = vmatpush1.bf16.msra.mxu0 0
          %1764 = vmatprep.subr.bf16.mxu0 0
          %1765 = vmatpush1.bf16.msra.mxu0 0
          %1766 = vmatprep.subr.bf16.mxu0 0
          %1767 = vmatpush1.bf16.msra.mxu0 0
          %1768 = vmatprep.subr.bf16.mxu0 0
          %1769 = vmatpush1.bf16.msra.mxu0 0
          %1770 = vmatprep.subr.bf16.mxu0 0
          %1771 = vmatpush1.bf16.msra.mxu0 0
          %1772 = vmatprep.subr.bf16.mxu0 0
          %1773 = vmatpush1.bf16.msra.mxu0 0
          %1774 = vmatprep.mubr.bf16.mxu0 0
          %1775 = vmatmul.mubr.bf16.gmra.mrb[0].mxu0 %v1740
          %v1776 = vpop.f32.mrb[0].mxu0
          %v1777 = vadd.f32 0.0, %v1776
          %v1778 = vpop.f32.mrb[0].mxu0
          %v1779 = vpop.f32.mrb[0].mxu0
          %v1780 = vpop.f32.mrb[0].mxu0
          %1781 = vdwg.mxu0
          %v1786 = vunpack.c.l.b16 %v1717
          %v1787 = vunpack.c.l.b16 %v1718
          %v1788 = vunpack.c.l.b16 %v1719
          %v1789 = vunpack.c.l.b16 %v1720
          %v1790 = vpack.c.b16 %v1787, %v1786
          %v1791 = vpack.c.b16 %v1789, %v1788
          %1794 = vmatprep.subr.bf16.mxu0 0
          %1795 = vmatpush1.bf16.msra.mxu0 %v1790
          %1796 = vmatprep.subr.bf16.mxu0 0
          %1797 = vmatpush1.bf16.msra.mxu0 %v1791
          %1798 = vmatprep.subr.bf16.mxu0 0
          %1799 = vmatpush1.bf16.msra.mxu0 0
          %1800 = vmatprep.subr.bf16.mxu0 0
          %1801 = vmatpush1.bf16.msra.mxu0 0
          %1802 = vmatprep.subr.bf16.mxu0 0
          %1803 = vmatpush1.bf16.msra.mxu0 0
          %1804 = vmatprep.subr.bf16.mxu0 0
          %1805 = vmatpush1.bf16.msra.mxu0 0
          %1806 = vmatprep.subr.bf16.mxu0 0
          %1807 = vmatpush1.bf16.msra.mxu0 0
          %1808 = vmatprep.subr.bf16.mxu0 0
          %1809 = vmatpush1.bf16.msra.mxu0 0
          %1810 = vmatprep.subr.bf16.mxu0 0
          %1811 = vmatpush1.bf16.msra.mxu0 0
          %1812 = vmatprep.subr.bf16.mxu0 0
          %1813 = vmatpush1.bf16.msra.mxu0 0
          %1814 = vmatprep.subr.bf16.mxu0 0
          %1815 = vmatpush1.bf16.msra.mxu0 0
          %1816 = vmatprep.subr.bf16.mxu0 0
          %1817 = vmatpush1.bf16.msra.mxu0 0
          %1818 = vmatprep.subr.bf16.mxu0 0
          %1819 = vmatpush1.bf16.msra.mxu0 0
          %1820 = vmatprep.subr.bf16.mxu0 0
          %1821 = vmatpush1.bf16.msra.mxu0 0
          %1822 = vmatprep.subr.bf16.mxu0 0
          %1823 = vmatpush1.bf16.msra.mxu0 0
          %1824 = vmatprep.subr.bf16.mxu0 0
          %1825 = vmatpush1.bf16.msra.mxu0 0
          %1826 = vmatprep.mubr.bf16.mxu0 0
          %1827 = vmatmul.mubr.bf16.gmra.mrb[0].mxu0 %v1647
          %v1828 = vpop.f32.mrb[0].mxu0
          %v1829 = vadd.f32 %v1777, %v1828
          %v1830 = vpop.f32.mrb[0].mxu0
          %v1831 = vpop.f32.mrb[0].mxu0
          %v1832 = vpop.f32.mrb[0].mxu0
          %1833 = vdwg.mxu0
          %v1834 = vld [vmem:[%s21] sm:$0x1]
          %v1836 = vlaneseq
          %v1837 = vshrl.u32 %v1836, 7
          %v1838 = vsub.s32 0, %v1837
          %v1839 = vrot.slane %v1834, %v1838
          %v1841 = vadd.f32 %v1829, %v1839
          %v1842 = vmax.f32 %v1841, 0.0
          %v1843 = vpack.c.bf16 %v1842, %v1842
          %v1844 = vld [vmem:[%s22] sm:$0xf]
          %v1845 = vld [vmem:[%s22 + $0x4] sm:$0xf]
          %v1846 = vld [vmem:[%s22 + $0x8] sm:$0xf]
          %v1847 = vld [vmem:[%s22 + $0xc] sm:$0xf]
          %v1852 = vunpack.c.l.b16 %v1844
          %v1853 = vunpack.c.l.b16 %v1845
          %v1854 = vunpack.c.l.b16 %v1846
          %v1855 = vunpack.c.l.b16 %v1847
          %v1856 = vpack.c.b16 %v1853, %v1852
          %v1857 = vpack.c.b16 %v1855, %v1854
          %v1861 = vsel %vm1158, %v1843, 0
          %1863 = vmatprep.subr.bf16.mxu0 0
          %1864 = vmatpush1.bf16.msra.mxu0 %v1856
          %1865 = vmatprep.subr.bf16.mxu0 0
          %1866 = vmatpush1.bf16.msra.mxu0 %v1857
          %1867 = vmatprep.subr.bf16.mxu0 0
          %1868 = vmatpush1.bf16.msra.mxu0 0
          %1869 = vmatprep.subr.bf16.mxu0 0
          %1870 = vmatpush1.bf16.msra.mxu0 0
          %1871 = vmatprep.subr.bf16.mxu0 0
          %1872 = vmatpush1.bf16.msra.mxu0 0
          %1873 = vmatprep.subr.bf16.mxu0 0
          %1874 = vmatpush1.bf16.msra.mxu0 0
          %1875 = vmatprep.subr.bf16.mxu0 0
          %1876 = vmatpush1.bf16.msra.mxu0 0
          %1877 = vmatprep.subr.bf16.mxu0 0
          %1878 = vmatpush1.bf16.msra.mxu0 0
          %1879 = vmatprep.subr.bf16.mxu0 0
          %1880 = vmatpush1.bf16.msra.mxu0 0
          %1881 = vmatprep.subr.bf16.mxu0 0
          %1882 = vmatpush1.bf16.msra.mxu0 0
          %1883 = vmatprep.subr.bf16.mxu0 0
          %1884 = vmatpush1.bf16.msra.mxu0 0
          %1885 = vmatprep.subr.bf16.mxu0 0
          %1886 = vmatpush1.bf16.msra.mxu0 0
          %1887 = vmatprep.subr.bf16.mxu0 0
          %1888 = vmatpush1.bf16.msra.mxu0 0
          %1889 = vmatprep.subr.bf16.mxu0 0
          %1890 = vmatpush1.bf16.msra.mxu0 0
          %1891 = vmatprep.subr.bf16.mxu0 0
          %1892 = vmatpush1.bf16.msra.mxu0 0
          %1893 = vmatprep.subr.bf16.mxu0 0
          %1894 = vmatpush1.bf16.msra.mxu0 0
          %1895 = vmatprep.mubr.bf16.mxu0 0
          %1896 = vmatmul.mubr.bf16.gmra.mrb[0].mxu0 %v1861
          %v1897 = vpop.f32.mrb[0].mxu0
          %v1898 = vadd.f32 0.0, %v1897
          %v1899 = vpop.f32.mrb[0].mxu0
          %v1900 = vpop.f32.mrb[0].mxu0
          %v1901 = vpop.f32.mrb[0].mxu0
          %1902 = vdwg.mxu0
          %v1903 = vadd.f32 %v827, %v1898
          %v1904 = vld [vmem:[%s23] sm:$0x1]
          %v1906 = vlaneseq
          %v1907 = vshrl.u32 %v1906, 7
          %v1908 = vsub.s32 0, %v1907
          %v1909 = vrot.slane %v1904, %v1908
          %v1911 = vadd.f32 %v1903, %v1909
          %1912 = vst.msk [vmem:[#allocation13] sm:$0xff] %vm1158, %v1911
        $region140: #{tpu_custom_call.1} parent=115 // pred_fallthru
          _
        // Predicated region
        $region141: #{tpu_custom_call.1} parent=115 // pred_check
          %p1913 = pneg %p570
        $region142: #{tpu_custom_call.1} parent=115 // pred_check_branch
          %1915 = sbr.rel (%p1913) target = $region144
        $region143: #{tpu_custom_call.1} parent=115 // pred_region
          %s1917 = ssub.s32 128, 128
          %1918 = vsyncadd [#allocation7], %s1917
          %s1920 = sshll.u32 [#allocation13], 4
          %s1921 = int_to_ptr.vmem [resolvable:$true] %s1920
          %1923 = dma.vmem_to_hbm [thread:$0]  %s1921, 128, %s24, [#allocation7]
        $region144: #{tpu_custom_call.1} parent=115 // pred_fallthru
          _
        // Predicated region
        $region145: #{tpu_custom_call.1} parent=115 // pred_check
          %p1924 = pneg %p591
        $region146: #{tpu_custom_call.1} parent=115 // pred_check_branch
          %1926 = sbr.rel (%p1924) target = $region148
        $region147: #{tpu_custom_call.1} parent=115 // pred_region
          _
        $region148: #{tpu_custom_call.1} parent=115 // pred_fallthru
          _
        // Predicated region
        $region149: #{tpu_custom_call.1} parent=115 // pred_check
          %p1927 = pneg %p570
        $region150: #{tpu_custom_call.1} parent=115 // pred_check_branch
          %1929 = sbr.rel (%p1927) target = $region152
        $region151: #{tpu_custom_call.1} parent=115 // pred_region
          %1930 = dma.done [#allocation7], 128
        $region152: #{tpu_custom_call.1} parent=115 // pred_fallthru
          _
        // Predicated region
        $region153: #{tpu_custom_call.1} parent=115 // pred_check
          %p1931 = pneg %p591
        $region154: #{tpu_custom_call.1} parent=115 // pred_check_branch
          %1933 = sbr.rel (%p1931) target = $region156
        $region155: #{tpu_custom_call.1} parent=115 // pred_region
          _
        $region156: #{tpu_custom_call.1} parent=115 // pred_fallthru
          _
      $region116: #{tpu_custom_call.1} parent=5 // pred_fallthru
        _
      %p1934 = scmp.le.s32.totalorder 2, %s38
      // Predicated region
      $region157: #{tpu_custom_call.1} parent=5 // pred_check
        %p1935 = pneg %p1934
      $region158: #{tpu_custom_call.1} parent=5 // pred_check_branch
        %1937 = sbr.rel (%p1935) target = $region160
      $region159: #{tpu_custom_call.1} parent=5 // pred_region
        %s1938 = ssub.s32 %s38, 2
      $region160: #{tpu_custom_call.1} parent=5 // pred_fallthru
        _
    $region6: #{tpu_custom_call.1} parent=1 // loop_footer
      %s42 = sadd.s32 1, %s38
    $region7: #{tpu_custom_call.1} parent=1 // loop_footer_branch
      %37 = sbr.rel target = $region3
    $region8: #{tpu_custom_call.1} parent=1 // loop_exit
      _
    %1939 = vsyncpa [#allocation6], 1
    %s1940 = scalar_lea.sflag [#allocation6], 1
    %1941 = vsyncpa %s1940, 1
    %1942 = vsyncpa [#allocation9], 1
    %1943 = vsyncpa [#allocation12], 1
    %1944 = vsyncpa [#allocation7], 1
    %s1945 = scalar_lea.sflag [#allocation7], 1
    %1946 = vsyncpa %s1945, 1

</llo_original>
